<compile_context>
chip_gen: v7x
topology: tpu7x:2x2x1
jax: 0.10.0
libtpu: 0.0.40
codegen_flags: <defaults>
</compile_context>

<pallas_src>
import functools

import jax
import jax.numpy as jnp
from jax import lax
from jax.experimental import pallas as pl
from jax.experimental.pallas import tpu as pltpu


def _round_up(x, m):
    return (x + m - 1) // m * m


def _jagged_pool_kernel(starts_ref, ends_ref, values_ref, weights_ref, table_ref,
                        out_ref, seg_scratch, acc_scratch,
                        *, mode, patch_value, v_tile):
    """One (batch_tile, vocab_tile) grid step of the pooled embedding lookup."""
    v_idx = pl.program_id(1)
    n_v = pl.num_programs(1)
    b_tile, n_pad = seg_scratch.shape

    @pl.when(v_idx == 0)
    def _init():
        # Weighted segment-membership matrix, built once per batch tile:
        #   S[b, j] = weight[j] if offsets[b] <= j < offsets[b+1] else 0
        j = lax.broadcasted_iota(jnp.int32, (b_tile, n_pad), 1)
        in_seg = (j >= starts_ref[...]) & (j < ends_ref[...])
        seg_scratch[...] = jnp.where(in_seg, weights_ref[...], 0.0)
        acc_scratch[...] = jnp.zeros_like(acc_scratch)

    # One-hot of the value indices against this vocabulary tile: (n_pad, v_tile).
    v0 = v_idx * v_tile
    vocab_ids = lax.broadcasted_iota(jnp.int32, (n_pad, v_tile), 1) + v0
    onehot = (values_ref[...] == vocab_ids).astype(jnp.float32)

    # out_tile += (S @ onehot) @ table_tile   -- both products on the MXU.
    t = jnp.dot(seg_scratch[...], onehot,
                preferred_element_type=jnp.float32,
                precision=lax.Precision.HIGHEST)
    acc_scratch[...] += jnp.dot(t, table_ref[...].astype(jnp.float32),
                                preferred_element_type=jnp.float32,
                                precision=lax.Precision.HIGHEST)

    @pl.when(v_idx == n_v - 1)
    def _finalize():
        counts = (ends_ref[...] - starts_ref[...]).astype(jnp.float32)  # (b_tile, 1)
        acc = acc_scratch[...]
        if mode == 'mean':
            acc = acc / jnp.maximum(counts, 1.0)
        out = jnp.where(counts > 0.0, acc, jnp.float32(patch_value))
        out_ref[...] = out.astype(out_ref.dtype)


def jagged_embedding_pool(table, values, offsets, weights, mode, patch_value,
                          *, b_tile=None, v_tile=None):
    """Pallas wrapper for one feature: table[values] -> weighted segment sum/mean."""
    if mode not in ('sum', 'mean'):
        raise ValueError("mode must be 'sum' or 'mean'")
    V, D = table.shape
    N = int(values.shape[0])
    B = int(offsets.shape[0]) - 1

    if weights is None:
        weights = jnp.ones((N,), jnp.float32)

    # Layout plumbing only (no compute hoisted out of the kernel): pad the jagged
    # dimension to a lane multiple, split offsets into start/end columns, pad the
    # batch to a sublane-aligned tile, pad the vocab to a whole number of V tiles.
    n_pad = max(128, _round_up(max(N, 1), 128))
    values_col = jnp.pad(values.astype(jnp.int32), (0, n_pad - N),
                         constant_values=-1).reshape(n_pad, 1)
    weights_row = jnp.pad(weights.astype(jnp.float32), (0, n_pad - N)).reshape(1, n_pad)

    if b_tile is None:
        b_tile = min(128, _round_up(B, 8))
    b_pad = _round_up(B, b_tile)
    starts = jnp.pad(offsets[:-1].astype(jnp.int32), (0, b_pad - B)).reshape(b_pad, 1)
    ends = jnp.pad(offsets[1:].astype(jnp.int32), (0, b_pad - B)).reshape(b_pad, 1)

    if v_tile is None:
        v_tile = min(512, _round_up(V, 8))
    v_pad = _round_up(V, v_tile)
    table_p = table if v_pad == V else jnp.pad(table, ((0, v_pad - V), (0, 0)))

    grid = (b_pad // b_tile, v_pad // v_tile)

    kernel = functools.partial(_jagged_pool_kernel, mode=mode,
                               patch_value=float(patch_value), v_tile=v_tile)

    out = pl.pallas_call(
        kernel,
        out_shape=jax.ShapeDtypeStruct((b_pad, D), table.dtype),
        grid_spec=pltpu.PrefetchScalarGridSpec(
            num_scalar_prefetch=0,
            grid=grid,
            in_specs=[
                pl.BlockSpec((b_tile, 1), lambda b, v: (b, 0)),    # segment starts
                pl.BlockSpec((b_tile, 1), lambda b, v: (b, 0)),    # segment ends
                pl.BlockSpec((n_pad, 1), lambda b, v: (0, 0)),     # value indices (column)
                pl.BlockSpec((1, n_pad), lambda b, v: (0, 0)),     # per-value weights (row)
                pl.BlockSpec((v_tile, D), lambda b, v: (v, 0)),    # table: HBM, streamed per V tile
            ],
            out_specs=pl.BlockSpec((b_tile, D), lambda b, v: (b, 0)),
            scratch_shapes=[
                pltpu.VMEM((b_tile, n_pad), jnp.float32),   # weighted segment matrix S
                pltpu.VMEM((b_tile, D), jnp.float32),       # f32 accumulator
            ],
        ),
        compiler_params=pltpu.CompilerParams(
            dimension_semantics=("parallel", "arbitrary")),
    )(starts, ends, values_col, weights_row, table_p)
    return out[:B]


def combine_jagged_embedding(tables, inputs, modes, patch_values):
    """Full forward: one Pallas kernel call per jagged feature."""
    assert len(modes) == len(inputs) == len(tables) == len(patch_values)
    outputs = []
    for i, inp in enumerate(inputs):
        outputs.append(
            jagged_embedding_pool(
                tables[i],
                inp['values'],
                inp['offsets'],
                inp.get('weights', None),
                modes[i],
                patch_values[i],
            )
        )
    return outputs


# ------------------------- pure-JAX reference ------------------------------

def _ref_jagged_pool(table, values, offsets, weights, mode, patch_value):
    emb = table[values]
    if weights is not None:
        emb = emb * weights[:, None]
    B = offsets.shape[0] - 1
    counts = offsets[1:] - offsets[:-1]
    seg_ids = jnp.repeat(jnp.arange(B), counts, total_repeat_length=values.shape[0])
    summed = jax.ops.segment_sum(emb, seg_ids, num_segments=B)
    if mode == 'mean':
        summed = summed / jnp.maximum(counts, 1).astype(jnp.float32)[:, None]
    empty = (counts == 0)[:, None]
    return jnp.where(empty, jnp.float32(patch_value), summed)


# --------------------------------- demo ------------------------------------

if __name__ == "__main__":
    key = jax.random.PRNGKey(0)
    k0, k1, kw = jax.random.split(key, 3)

    num_embeddings = 64
    dimensions = [32, 16]          # embedding dims per feature
    modes = ['sum', 'mean']
    patch_values = [0.0, 1.5]
    batch = 4

    # Deterministic "parameters" (embedding tables).
    tables = [
        jax.random.normal(k0, (num_embeddings, dimensions[0]), jnp.float32) * 0.1,
        jax.random.normal(k1, (num_embeddings, dimensions[1]), jnp.float32) * 0.1,
    ]

    # Jagged feature 0: 10 values, one empty segment, with per-value weights.
    values0 = jnp.array([3, 17, 42, 5, 9, 11, 60, 2, 33, 8], dtype=jnp.int32)
    offsets0 = jnp.array([0, 3, 3, 7, 10], dtype=jnp.int32)
    weights0 = jax.random.uniform(kw, (values0.shape[0],), jnp.float32, 0.5, 1.5)

    # Jagged feature 1: 8 values, one empty segment, no weights.
    values1 = jnp.array([1, 4, 19, 23, 7, 55, 30, 12], dtype=jnp.int32)
    offsets1 = jnp.array([0, 2, 5, 5, 8], dtype=jnp.int32)

    inputs = [
        {'values': values0, 'offsets': offsets0, 'weights': weights0},
        {'values': values1, 'offsets': offsets1},
    ]

    outs = combine_jagged_embedding(tables, inputs, modes, patch_values)
    outs = [jax.block_until_ready(o) for o in outs]

    refs = [
        _ref_jagged_pool(tables[0], values0, offsets0, weights0, 'sum', 0.0),
        _ref_jagged_pool(tables[1], values1, offsets1, None, 'mean', 1.5),
    ]

    # Tolerance allows for MXU f32 pass-precision differences vs the XLA reference.
    for o, r in zip(outs, refs):
        assert o.shape == r.shape and o.dtype == r.dtype
        assert jnp.allclose(o, r, atol=1e-2, rtol=1e-2)

    print("KERNEL_OK")
</pallas_src>

<mosaic_0001>
module attributes {stable_mosaic.version = 11 : i64} {
  func.func @_jagged_pool_kernel(%arg0: i32, %arg1: i32, %arg2: memref<8x1xi32, #tpu.memory_space<vmem>>, %arg3: memref<8x1xi32, #tpu.memory_space<vmem>>, %arg4: memref<128x1xi32, #tpu.memory_space<vmem>>, %arg5: memref<1x128xf32, #tpu.memory_space<vmem>>, %arg6: memref<64x32xf32, #tpu.memory_space<vmem>>, %arg7: memref<8x32xf32, #tpu.memory_space<vmem>>, %arg8: memref<8x128xf32, #tpu.memory_space<vmem>>, %arg9: memref<8x32xf32, #tpu.memory_space<vmem>>) attributes {dimension_semantics = [#tpu.dimension_semantics<parallel>, #tpu.dimension_semantics<arbitrary>], iteration_bounds = array<i64: 1, 1>, scalar_prefetch = 0 : i64, scratch_operands = 2 : i64, tpu.core_type = #tpu.core_type<tc>, window_params = [{transform_indices = @transform_0, window_bounds = array<i64: 8, 1>}, {transform_indices = @transform_1, window_bounds = array<i64: 8, 1>}, {pipeline_mode = #tpu.pipeline_mode<synchronous>, transform_indices = @transform_2, window_bounds = array<i64: 128, 1>}, {pipeline_mode = #tpu.pipeline_mode<synchronous>, transform_indices = @transform_3, window_bounds = array<i64: 1, 128>}, {transform_indices = @transform_4, window_bounds = array<i64: 64, 32>}, {transform_indices = @transform_5, window_bounds = array<i64: 8, 32>}]} {
    %c0_i32 = arith.constant 0 : i32
    %0 = arith.cmpi eq, %arg1, %c0_i32 : i32
    %1 = arith.extui %0 : i1 to i32
    %c0_i32_0 = arith.constant 0 : i32
    %2 = arith.cmpi ne, %1, %c0_i32_0 : i32
    scf.if %2 {
      %22 = tpu.iota {dimensions = array<i32: 1>} : vector<8x128xi32>
      %c0_13 = arith.constant 0 : index
      %c0_14 = arith.constant 0 : index
      %23 = vector.load %arg2[%c0_13, %c0_14] : memref<8x1xi32, #tpu.memory_space<vmem>>, vector<8x1xi32>
      %24 = vector.broadcast %23 : vector<8x1xi32> to vector<8x128xi32>
      %25 = arith.cmpi sge, %22, %24 : vector<8x128xi32>
      %c0_15 = arith.constant 0 : index
      %c0_16 = arith.constant 0 : index
      %26 = vector.load %arg3[%c0_15, %c0_16] : memref<8x1xi32, #tpu.memory_space<vmem>>, vector<8x1xi32>
      %27 = vector.broadcast %26 : vector<8x1xi32> to vector<8x128xi32>
      %28 = arith.cmpi slt, %22, %27 : vector<8x128xi32>
      %29 = arith.andi %25, %28 : vector<8x128xi1>
      %c0_17 = arith.constant 0 : index
      %c0_18 = arith.constant 0 : index
      %30 = vector.load %arg5[%c0_17, %c0_18] : memref<1x128xf32, #tpu.memory_space<vmem>>, vector<1x128xf32>
      %cst_19 = arith.constant 0.000000e+00 : f32
      %31 = vector.shape_cast %30 : vector<1x128xf32> to vector<1x128xf32>
      %32 = vector.broadcast %31 : vector<1x128xf32> to vector<8x128xf32>
      %33 = vector.broadcast %cst_19 : f32 to vector<8x128xf32>
      %34 = arith.select %29, %32, %33 : vector<8x128xi1>, vector<8x128xf32>
      %c0_20 = arith.constant 0 : index
      %c0_21 = arith.constant 0 : index
      %35 = vector.load %arg8[%c0_20, %c0_21] : memref<8x128xf32, #tpu.memory_space<vmem>>, vector<8x128xf32>
      tpu.vector_store %arg8[%c0_20, %c0_21], %34 {strides = array<i32>} : memref<8x128xf32, #tpu.memory_space<vmem>>, vector<8x128xf32>,
      %cst_22 = arith.constant 0.000000e+00 : f32
      %36 = vector.broadcast %cst_22 : f32 to vector<8x32xf32>
      %c0_23 = arith.constant 0 : index
      %c0_24 = arith.constant 0 : index
      %37 = vector.load %arg9[%c0_23, %c0_24] : memref<8x32xf32, #tpu.memory_space<vmem>>, vector<8x32xf32>
      tpu.vector_store %arg9[%c0_23, %c0_24], %36 {strides = array<i32>} : memref<8x32xf32, #tpu.memory_space<vmem>>, vector<8x32xf32>,
    } else {
    }
    %c64_i32 = arith.constant 64 : i32
    %3 = arith.muli %arg1, %c64_i32 : i32
    %4 = tpu.iota {dimensions = array<i32: 1>} : vector<128x64xi32>
    %5 = vector.broadcast %3 : i32 to vector<128x64xi32>
    %6 = arith.addi %4, %5 : vector<128x64xi32>
    %c0 = arith.constant 0 : index
    %c0_1 = arith.constant 0 : index
    %7 = vector.load %arg4[%c0, %c0_1] : memref<128x1xi32, #tpu.memory_space<vmem>>, vector<128x1xi32>
    %8 = vector.broadcast %7 : vector<128x1xi32> to vector<128x64xi32>
    %9 = arith.cmpi eq, %8, %6 : vector<128x64xi32>
    %10 = arith.extui %9 : vector<128x64xi1> to vector<128x64xi32>
    %11 = arith.sitofp %10 : vector<128x64xi32> to vector<128x64xf32>
    %c0_2 = arith.constant 0 : index
    %c0_3 = arith.constant 0 : index
    %12 = vector.load %arg8[%c0_2, %c0_3] : memref<8x128xf32, #tpu.memory_space<vmem>>, vector<8x128xf32>
    %cst = arith.constant dense<0.000000e+00> : vector<8x64xf32>
    %13 = tpu.matmul %12, %11, %cst {dimension_numbers = #tpu.dot_dimension_numbers<[1], [0], [0], [1], [0, 0, 1, 1], [], []>, precision = #tpu.contract_precision<fp32>} : vector<8x128xf32>, vector<128x64xf32>, vector<8x64xf32> -> vector<8x64xf32>
    %c0_4 = arith.constant 0 : index
    %c0_5 = arith.constant 0 : index
    %14 = vector.load %arg9[%c0_4, %c0_5] : memref<8x32xf32, #tpu.memory_space<vmem>>, vector<8x32xf32>
    %c0_6 = arith.constant 0 : index
    %c0_7 = arith.constant 0 : index
    %15 = vector.load %arg6[%c0_6, %c0_7] : memref<64x32xf32, #tpu.memory_space<vmem>>, vector<64x32xf32>
    %cst_8 = arith.constant dense<0.000000e+00> : vector<8x32xf32>
    %16 = tpu.matmul %13, %15, %cst_8 {dimension_numbers = #tpu.dot_dimension_numbers<[1], [0], [0], [1], [0, 0, 1, 1], [], []>, precision = #tpu.contract_precision<fp32>} : vector<8x64xf32>, vector<64x32xf32>, vector<8x32xf32> -> vector<8x32xf32>
    %17 = arith.addf %14, %16 : vector<8x32xf32>
    %c0_9 = arith.constant 0 : index
    %c0_10 = arith.constant 0 : index
    %18 = vector.load %arg9[%c0_9, %c0_10] : memref<8x32xf32, #tpu.memory_space<vmem>>, vector<8x32xf32>
    tpu.vector_store %arg9[%c0_9, %c0_10], %17 {strides = array<i32>} : memref<8x32xf32, #tpu.memory_space<vmem>>, vector<8x32xf32>,
    %c0_i32_11 = arith.constant 0 : i32
    %19 = arith.cmpi eq, %arg1, %c0_i32_11 : i32
    %20 = arith.extui %19 : i1 to i32
    %c0_i32_12 = arith.constant 0 : i32
    %21 = arith.cmpi ne, %20, %c0_i32_12 : i32
    scf.if %21 {
      %c0_13 = arith.constant 0 : index
      %c0_14 = arith.constant 0 : index
      %22 = vector.load %arg3[%c0_13, %c0_14] : memref<8x1xi32, #tpu.memory_space<vmem>>, vector<8x1xi32>
      %c0_15 = arith.constant 0 : index
      %c0_16 = arith.constant 0 : index
      %23 = vector.load %arg2[%c0_15, %c0_16] : memref<8x1xi32, #tpu.memory_space<vmem>>, vector<8x1xi32>
      %24 = arith.subi %22, %23 : vector<8x1xi32>
      %25 = arith.sitofp %24 : vector<8x1xi32> to vector<8x1xf32>
      %c0_17 = arith.constant 0 : index
      %c0_18 = arith.constant 0 : index
      %26 = vector.load %arg9[%c0_17, %c0_18] : memref<8x32xf32, #tpu.memory_space<vmem>>, vector<8x32xf32>
      %cst_19 = arith.constant 0.000000e+00 : f32
      %27 = vector.broadcast %cst_19 : f32 to vector<8x1xf32>
      %28 = arith.cmpf ogt, %25, %27 : vector<8x1xf32>
      %cst_20 = arith.constant 0.000000e+00 : f32
      %29 = vector.shape_cast %28 : vector<8x1xi1> to vector<8x1xi1>
      %30 = vector.broadcast %29 : vector<8x1xi1> to vector<8x32xi1>
      %31 = vector.broadcast %cst_20 : f32 to vector<8x32xf32>
      %32 = arith.select %30, %26, %31 : vector<8x32xi1>, vector<8x32xf32>
      %c0_21 = arith.constant 0 : index
      %c0_22 = arith.constant 0 : index
      %33 = vector.load %arg7[%c0_21, %c0_22] : memref<8x32xf32, #tpu.memory_space<vmem>>, vector<8x32xf32>
      tpu.vector_store %arg7[%c0_21, %c0_22], %32 {strides = array<i32>} : memref<8x32xf32, #tpu.memory_space<vmem>>, vector<8x32xf32>,
    } else {
    }
    return
  }
  func.func @transform_0(%arg0: i32, %arg1: i32) -> (i32, i32) {
    %c0_i32 = arith.constant 0 : i32
    %c0_i32_0 = arith.constant 0 : i32
    return %arg0, %c0_i32 : i32, i32
  }
  func.func @transform_1(%arg0: i32, %arg1: i32) -> (i32, i32) {
    %c0_i32 = arith.constant 0 : i32
    %c0_i32_0 = arith.constant 0 : i32
    return %arg0, %c0_i32 : i32, i32
  }
  func.func @transform_2(%arg0: i32, %arg1: i32) -> (i32, i32) {
    %c0_i32 = arith.constant 0 : i32
    %c0_i32_0 = arith.constant 0 : i32
    %c0_i32_1 = arith.constant 0 : i32
    return %c0_i32, %c0_i32_0 : i32, i32
  }
  func.func @transform_3(%arg0: i32, %arg1: i32) -> (i32, i32) {
    %c0_i32 = arith.constant 0 : i32
    %c0_i32_0 = arith.constant 0 : i32
    %c0_i32_1 = arith.constant 0 : i32
    return %c0_i32, %c0_i32_0 : i32, i32
  }
  func.func @transform_4(%arg0: i32, %arg1: i32) -> (i32, i32) {
    %c0_i32 = arith.constant 0 : i32
    %c0_i32_0 = arith.constant 0 : i32
    return %arg1, %c0_i32 : i32, i32
  }
  func.func @transform_5(%arg0: i32, %arg1: i32) -> (i32, i32) {
    %c0_i32 = arith.constant 0 : i32
    %c0_i32_0 = arith.constant 0 : i32
    return %arg0, %c0_i32 : i32, i32
  }
}

</mosaic_0001>

<llo_original>
// kernel: tpu_custom_call.1
$region0: #{tpu_custom_call.1}
  #allocation0 [shape = 'u32[]', space=smem, size = 0x4, offset = 0x4, fixed_abs, tag = 'smem constant byte address 0x4 - core index']
  #allocation1 [shape = 'u32[144,128]{1,0:T(1,128)}', space=vmem, size = 0x12000, scoped, tag = 'internal scratch']
  #allocation2 [shape = 'f32[8,128]{1,0:T(8,128)}', space=vmem, size = 0x1000, scoped, tag = 'scratch operand']
  #allocation3 [shape = 'f32[8,32]{1,0:T(8,128)}', space=vmem, size = 0x1000, scoped, tag = 'scratch operand']
  %s0 = inlined_call_operand.vmem [shape: s32[8,1], index: 0, kind: input, shape index: {}]
  %s1 = inlined_call_operand.vmem [shape: s32[8,1], index: 1, kind: input, shape index: {}]
  %s2 = inlined_call_operand.vmem [shape: s32[128,1], index: 2, kind: input, shape index: {}]
  %s3 = inlined_call_operand.vmem [shape: f32[1,128], index: 3, kind: input, shape index: {}]
  %s4 = inlined_call_operand.vmem [shape: f32[64,32], index: 4, kind: input, shape index: {}]
  %s5 = inlined_call_operand.hbm [shape: f32[8,32], index: 5, kind: output, shape index: {}]
  %s6 = sld [smem:[#allocation0]]
  $region38: #{tpu_custom_call.1} parent=0
    _
  %s8 = ssub.s32 1, %s6
  %s9 = scalar_select 0, %s8, %s6
  $region1: #{tpu_custom_call.1} parent=0
    #allocation4 [shape = 'u8[4096]{0}', space=vmem, size = 0x1000, scoped, tag = 'output window, operand 0, single buffered']
    #allocation5 [shape = 's32[1]{0}', space=sflag, size = 0x4, scoped, tag = 'scoped memory for tpu_custom_call.1']
    %10 = vsyncpa [#allocation5], 0
    // Predicated region
    $region2: #{tpu_custom_call.1} parent=1 // pred_check
      _
    $region3: #{tpu_custom_call.1} parent=1 // pred_check_branch
      %12 = sbr.rel (0) target = $region5
    $region4: #{tpu_custom_call.1} parent=1 // pred_region
      _
    $region5: #{tpu_custom_call.1} parent=1 // pred_fallthru
      _
    // Predicated region
    $region6: #{tpu_custom_call.1} parent=1 // pred_check
      _
    $region7: #{tpu_custom_call.1} parent=1 // pred_check_branch
      %14 = sbr.rel (0) target = $region9
    $region8: #{tpu_custom_call.1} parent=1 // pred_region
      _
    $region9: #{tpu_custom_call.1} parent=1 // pred_fallthru
      _
    // Predicated region
    $region10: #{tpu_custom_call.1} parent=1 // pred_check
      _
    $region11: #{tpu_custom_call.1} parent=1 // pred_check_branch
      %16 = sbr.rel (0) target = $region13
    $region12: #{tpu_custom_call.1} parent=1 // pred_region
      _
    $region13: #{tpu_custom_call.1} parent=1 // pred_fallthru
      _
    // Predicated region
    $region14: #{tpu_custom_call.1} parent=1 // pred_check
      _
    $region15: #{tpu_custom_call.1} parent=1 // pred_check_branch
      %18 = sbr.rel (0) target = $region17
    $region16: #{tpu_custom_call.1} parent=1 // pred_region
      _
    $region17: #{tpu_custom_call.1} parent=1 // pred_fallthru
      _
    // Predicated region
    $region18: #{tpu_custom_call.1} parent=1 // pred_check
      _
    $region19: #{tpu_custom_call.1} parent=1 // pred_check_branch
      %20 = sbr.rel (0) target = $region21
    $region20: #{tpu_custom_call.1} parent=1 // pred_region
      _
    $region21: #{tpu_custom_call.1} parent=1 // pred_fallthru
      _
    %p21 = scmp.eq.s32.totalorder 0, 0
    // Predicated region
    $region22: #{tpu_custom_call.1} parent=1 // pred_check
      %p22 = pneg %p21
    $region23: #{tpu_custom_call.1} parent=1 // pred_check_branch
      %24 = sbr.rel (%p22) target = $region25
    $region24: #{tpu_custom_call.1} parent=1 // pred_region
      %v25 = vlaneseq
      %v26 = vand.u32 %v25, 127
      %v27 = vld [vmem:[%s0] sm:$0xff]
      %28 = vset.pattern.permute.xlu0 0
      %29 = vperm.xlu0 %28, %v27
      %v30 = vpop.permute.xlu0 %29
      %vm31 = vcmp.ge.s32.totalorder %v26, %v30
      %v32 = vld [vmem:[%s1] sm:$0xff]
      %33 = vset.pattern.permute.xlu0 0
      %34 = vperm.xlu0 %33, %v32
      %v35 = vpop.permute.xlu0 %34
      %vm36 = vcmp.lt.s32.totalorder %v26, %v35
      %vm37 = vmand %vm31, %vm36
      %v38 = vld [vmem:[%s3] sm:$0x1]
      %v40 = vlaneseq
      %v41 = vshrl.u32 %v40, 7
      %v42 = vsub.s32 0, %v41
      %v43 = vrot.slane %v38, %v42
      %v45 = vsel %vm37, %v43, 0.0
      %46 = vst [vmem:[#allocation2] sm:$0xff] %v45
      %vm47 = vcmask 261120
      %48 = vst.msk [vmem:[#allocation3] sm:$0xff] %vm47, 0.0
    $region25: #{tpu_custom_call.1} parent=1 // pred_fallthru
      _
    %s49 = smul.u32 0, 64
    %v50 = vlaneseq
    %v51 = vand.u32 %v50, 127
    %v52 = vstv %s49
    %v53 = vadd.s32 %v51, %v52
    %v54 = vld [vmem:[%s2] sm:$0xff]
    %v55 = vld [vmem:[%s2 + $0x8] sm:$0xff]
    %v56 = vld [vmem:[%s2 + $0x10] sm:$0xff]
    %v57 = vld [vmem:[%s2 + $0x18] sm:$0xff]
    %v58 = vld [vmem:[%s2 + $0x20] sm:$0xff]
    %v59 = vld [vmem:[%s2 + $0x28] sm:$0xff]
    %v60 = vld [vmem:[%s2 + $0x30] sm:$0xff]
    %v61 = vld [vmem:[%s2 + $0x38] sm:$0xff]
    %v62 = vld [vmem:[%s2 + $0x40] sm:$0xff]
    %v63 = vld [vmem:[%s2 + $0x48] sm:$0xff]
    %v64 = vld [vmem:[%s2 + $0x50] sm:$0xff]
    %v65 = vld [vmem:[%s2 + $0x58] sm:$0xff]
    %v66 = vld [vmem:[%s2 + $0x60] sm:$0xff]
    %v67 = vld [vmem:[%s2 + $0x68] sm:$0xff]
    %v68 = vld [vmem:[%s2 + $0x70] sm:$0xff]
    %v69 = vld [vmem:[%s2 + $0x78] sm:$0xff]
    %70 = vset.pattern.permute.xlu0 0
    %71 = vperm.xlu0 %70, %v54
    %v72 = vpop.permute.xlu0 %71
    %73 = vset.pattern.permute.xlu0 0
    %74 = vperm.xlu0 %73, %v55
    %v75 = vpop.permute.xlu0 %74
    %76 = vset.pattern.permute.xlu0 0
    %77 = vperm.xlu0 %76, %v56
    %v78 = vpop.permute.xlu0 %77
    %79 = vset.pattern.permute.xlu0 0
    %80 = vperm.xlu0 %79, %v57
    %v81 = vpop.permute.xlu0 %80
    %82 = vset.pattern.permute.xlu0 0
    %83 = vperm.xlu0 %82, %v58
    %v84 = vpop.permute.xlu0 %83
    %85 = vset.pattern.permute.xlu0 0
    %86 = vperm.xlu0 %85, %v59
    %v87 = vpop.permute.xlu0 %86
    %88 = vset.pattern.permute.xlu0 0
    %89 = vperm.xlu0 %88, %v60
    %v90 = vpop.permute.xlu0 %89
    %91 = vset.pattern.permute.xlu0 0
    %92 = vperm.xlu0 %91, %v61
    %v93 = vpop.permute.xlu0 %92
    %94 = vset.pattern.permute.xlu0 0
    %95 = vperm.xlu0 %94, %v62
    %v96 = vpop.permute.xlu0 %95
    %97 = vset.pattern.permute.xlu0 0
    %98 = vperm.xlu0 %97, %v63
    %v99 = vpop.permute.xlu0 %98
    %100 = vset.pattern.permute.xlu0 0
    %101 = vperm.xlu0 %100, %v64
    %v102 = vpop.permute.xlu0 %101
    %103 = vset.pattern.permute.xlu0 0
    %104 = vperm.xlu0 %103, %v65
    %v105 = vpop.permute.xlu0 %104
    %106 = vset.pattern.permute.xlu0 0
    %107 = vperm.xlu0 %106, %v66
    %v108 = vpop.permute.xlu0 %107
    %109 = vset.pattern.permute.xlu0 0
    %110 = vperm.xlu0 %109, %v67
    %v111 = vpop.permute.xlu0 %110
    %112 = vset.pattern.permute.xlu0 0
    %113 = vperm.xlu0 %112, %v68
    %v114 = vpop.permute.xlu0 %113
    %115 = vset.pattern.permute.xlu0 0
    %116 = vperm.xlu0 %115, %v69
    %v117 = vpop.permute.xlu0 %116
    %vm118 = vcmp.eq.s32.totalorder %v72, %v53
    %vm119 = vcmp.eq.s32.totalorder %v75, %v53
    %vm120 = vcmp.eq.s32.totalorder %v78, %v53
    %vm121 = vcmp.eq.s32.totalorder %v81, %v53
    %vm122 = vcmp.eq.s32.totalorder %v84, %v53
    %vm123 = vcmp.eq.s32.totalorder %v87, %v53
    %vm124 = vcmp.eq.s32.totalorder %v90, %v53
    %vm125 = vcmp.eq.s32.totalorder %v93, %v53
    %vm126 = vcmp.eq.s32.totalorder %v96, %v53
    %vm127 = vcmp.eq.s32.totalorder %v99, %v53
    %vm128 = vcmp.eq.s32.totalorder %v102, %v53
    %vm129 = vcmp.eq.s32.totalorder %v105, %v53
    %vm130 = vcmp.eq.s32.totalorder %v108, %v53
    %vm131 = vcmp.eq.s32.totalorder %v111, %v53
    %vm132 = vcmp.eq.s32.totalorder %v114, %v53
    %vm133 = vcmp.eq.s32.totalorder %v117, %v53
    %v134 = vsel %vm118, 1, 0
    %v135 = vsel %vm119, 1, 0
    %v136 = vsel %vm120, 1, 0
    %v137 = vsel %vm121, 1, 0
    %v138 = vsel %vm122, 1, 0
    %v139 = vsel %vm123, 1, 0
    %v140 = vsel %vm124, 1, 0
    %v141 = vsel %vm125, 1, 0
    %v142 = vsel %vm126, 1, 0
    %v143 = vsel %vm127, 1, 0
    %v144 = vsel %vm128, 1, 0
    %v145 = vsel %vm129, 1, 0
    %v146 = vsel %vm130, 1, 0
    %v147 = vsel %vm131, 1, 0
    %v148 = vsel %vm132, 1, 0
    %v149 = vsel %vm133, 1, 0
    %v150 = vcvt.s32.f32 %v134
    %v151 = vcvt.s32.f32 %v135
    %v152 = vcvt.s32.f32 %v136
    %v153 = vcvt.s32.f32 %v137
    %v154 = vcvt.s32.f32 %v138
    %v155 = vcvt.s32.f32 %v139
    %v156 = vcvt.s32.f32 %v140
    %v157 = vcvt.s32.f32 %v141
    %v158 = vcvt.s32.f32 %v142
    %v159 = vcvt.s32.f32 %v143
    %v160 = vcvt.s32.f32 %v144
    %v161 = vcvt.s32.f32 %v145
    %v162 = vcvt.s32.f32 %v146
    %v163 = vcvt.s32.f32 %v147
    %v164 = vcvt.s32.f32 %v148
    %v165 = vcvt.s32.f32 %v149
    %v166 = vld [vmem:[#allocation2] sm:$0xff]
    %167 = vmatprep.subr.mxu0 0.0
    %v168 = vand.u32 %v150, 4294901760
    %169 = vmatpush1.msra.mxu0 %v168
    %170 = vmatprep.subr.mxu0 0.0
    %v171 = vand.u32 %v151, 4294901760
    %172 = vmatpush1.msra.mxu0 %v171
    %173 = vmatprep.subr.mxu0 0.0
    %v174 = vand.u32 %v152, 4294901760
    %175 = vmatpush1.msra.mxu0 %v174
    %176 = vmatprep.subr.mxu0 0.0
    %v177 = vand.u32 %v153, 4294901760
    %178 = vmatpush1.msra.mxu0 %v177
    %179 = vmatprep.subr.mxu0 0.0
    %v180 = vand.u32 %v154, 4294901760
    %181 = vmatpush1.msra.mxu0 %v180
    %182 = vmatprep.subr.mxu0 0.0
    %v183 = vand.u32 %v155, 4294901760
    %184 = vmatpush1.msra.mxu0 %v183
    %185 = vmatprep.subr.mxu0 0.0
    %v186 = vand.u32 %v156, 4294901760
    %187 = vmatpush1.msra.mxu0 %v186
    %188 = vmatprep.subr.mxu0 0.0
    %v189 = vand.u32 %v157, 4294901760
    %190 = vmatpush1.msra.mxu0 %v189
    %191 = vmatprep.subr.mxu0 0.0
    %v192 = vand.u32 %v158, 4294901760
    %193 = vmatpush1.msra.mxu0 %v192
    %194 = vmatprep.subr.mxu0 0.0
    %v195 = vand.u32 %v159, 4294901760
    %196 = vmatpush1.msra.mxu0 %v195
    %197 = vmatprep.subr.mxu0 0.0
    %v198 = vand.u32 %v160, 4294901760
    %199 = vmatpush1.msra.mxu0 %v198
    %200 = vmatprep.subr.mxu0 0.0
    %v201 = vand.u32 %v161, 4294901760
    %202 = vmatpush1.msra.mxu0 %v201
    %203 = vmatprep.subr.mxu0 0.0
    %v204 = vand.u32 %v162, 4294901760
    %205 = vmatpush1.msra.mxu0 %v204
    %206 = vmatprep.subr.mxu0 0.0
    %v207 = vand.u32 %v163, 4294901760
    %208 = vmatpush1.msra.mxu0 %v207
    %209 = vmatprep.subr.mxu0 0.0
    %v210 = vand.u32 %v164, 4294901760
    %211 = vmatpush1.msra.mxu0 %v210
    %212 = vmatprep.subr.mxu0 0.0
    %v213 = vand.u32 %v165, 4294901760
    %214 = vmatpush1.msra.mxu0 %v213
    %215 = vmatprep.subr.mxu0 0.0
    %216 = vmatpush1.msra.mxu0 0.0
    %217 = vmatprep.subr.mxu0 0.0
    %218 = vmatpush1.msra.mxu0 0.0
    %219 = vmatprep.subr.mxu0 0.0
    %220 = vmatpush1.msra.mxu0 0.0
    %221 = vmatprep.subr.mxu0 0.0
    %222 = vmatpush1.msra.mxu0 0.0
    %223 = vmatprep.subr.mxu0 0.0
    %224 = vmatpush1.msra.mxu0 0.0
    %225 = vmatprep.subr.mxu0 0.0
    %226 = vmatpush1.msra.mxu0 0.0
    %227 = vmatprep.subr.mxu0 0.0
    %228 = vmatpush1.msra.mxu0 0.0
    %229 = vmatprep.subr.mxu0 0.0
    %230 = vmatpush1.msra.mxu0 0.0
    %231 = vmatprep.subr.mxu0 0.0
    %232 = vmatpush1.msra.mxu0 0.0
    %233 = vmatprep.subr.mxu0 0.0
    %234 = vmatpush1.msra.mxu0 0.0
    %235 = vmatprep.subr.mxu0 0.0
    %236 = vmatpush1.msra.mxu0 0.0
    %237 = vmatprep.subr.mxu0 0.0
    %238 = vmatpush1.msra.mxu0 0.0
    %239 = vmatprep.subr.mxu0 0.0
    %240 = vmatpush1.msra.mxu0 0.0
    %241 = vmatprep.subr.mxu0 0.0
    %242 = vmatpush1.msra.mxu0 0.0
    %243 = vmatprep.subr.mxu0 0.0
    %244 = vmatpush1.msra.mxu0 0.0
    %245 = vmatprep.subr.mxu0 0.0
    %246 = vmatpush1.msra.mxu0 0.0
    %247 = vmatprep.mubr.f32.mxu0 0.0
    %v248 = vand.u32 %v166, 4294901760
    %v249 = vsub.f32 %v166, %v248
    %v250 = vand.u32 %v249, 4294901760
    %v251 = vsub.f32 %v249, %v250
    %v252 = vand.u32 %v251, 4294901760
    %253 = vmatmul.mubr.f32.gmra.mrb[0].mxu0 %v252
    %v254 = vpop.f32.mrb[0].mxu0
    %v255 = vadd.f32 0.0, %v254
    %v256 = vpop.f32.mrb[0].mxu0
    %257 = vdwg.mxu0
    %258 = vmatprep.subr.mxu0 0.0
    %v259 = vand.u32 %v150, 4294901760
    %v260 = vsub.f32 %v150, %v259
    %v261 = vand.u32 %v260, 4294901760
    %v262 = vsub.f32 %v260, %v261
    %v263 = vand.u32 %v262, 4294901760
    %264 = vmatpush1.msra.mxu0 %v263
    %265 = vmatprep.subr.mxu0 0.0
    %v266 = vand.u32 %v151, 4294901760
    %v267 = vsub.f32 %v151, %v266
    %v268 = vand.u32 %v267, 4294901760
    %v269 = vsub.f32 %v267, %v268
    %v270 = vand.u32 %v269, 4294901760
    %271 = vmatpush1.msra.mxu0 %v270
    %272 = vmatprep.subr.mxu0 0.0
    %v273 = vand.u32 %v152, 4294901760
    %v274 = vsub.f32 %v152, %v273
    %v275 = vand.u32 %v274, 4294901760
    %v276 = vsub.f32 %v274, %v275
    %v277 = vand.u32 %v276, 4294901760
    %278 = vmatpush1.msra.mxu0 %v277
    %279 = vmatprep.subr.mxu0 0.0
    %v280 = vand.u32 %v153, 4294901760
    %v281 = vsub.f32 %v153, %v280
    %v282 = vand.u32 %v281, 4294901760
    %v283 = vsub.f32 %v281, %v282
    %v284 = vand.u32 %v283, 4294901760
    %285 = vmatpush1.msra.mxu0 %v284
    %286 = vmatprep.subr.mxu0 0.0
    %v287 = vand.u32 %v154, 4294901760
    %v288 = vsub.f32 %v154, %v287
    %v289 = vand.u32 %v288, 4294901760
    %v290 = vsub.f32 %v288, %v289
    %v291 = vand.u32 %v290, 4294901760
    %292 = vmatpush1.msra.mxu0 %v291
    %293 = vmatprep.subr.mxu0 0.0
    %v294 = vand.u32 %v155, 4294901760
    %v295 = vsub.f32 %v155, %v294
    %v296 = vand.u32 %v295, 4294901760
    %v297 = vsub.f32 %v295, %v296
    %v298 = vand.u32 %v297, 4294901760
    %299 = vmatpush1.msra.mxu0 %v298
    %300 = vmatprep.subr.mxu0 0.0
    %v301 = vand.u32 %v156, 4294901760
    %v302 = vsub.f32 %v156, %v301
    %v303 = vand.u32 %v302, 4294901760
    %v304 = vsub.f32 %v302, %v303
    %v305 = vand.u32 %v304, 4294901760
    %306 = vmatpush1.msra.mxu0 %v305
    %307 = vmatprep.subr.mxu0 0.0
    %v308 = vand.u32 %v157, 4294901760
    %v309 = vsub.f32 %v157, %v308
    %v310 = vand.u32 %v309, 4294901760
    %v311 = vsub.f32 %v309, %v310
    %v312 = vand.u32 %v311, 4294901760
    %313 = vmatpush1.msra.mxu0 %v312
    %314 = vmatprep.subr.mxu0 0.0
    %v315 = vand.u32 %v158, 4294901760
    %v316 = vsub.f32 %v158, %v315
    %v317 = vand.u32 %v316, 4294901760
    %v318 = vsub.f32 %v316, %v317
    %v319 = vand.u32 %v318, 4294901760
    %320 = vmatpush1.msra.mxu0 %v319
    %321 = vmatprep.subr.mxu0 0.0
    %v322 = vand.u32 %v159, 4294901760
    %v323 = vsub.f32 %v159, %v322
    %v324 = vand.u32 %v323, 4294901760
    %v325 = vsub.f32 %v323, %v324
    %v326 = vand.u32 %v325, 4294901760
    %327 = vmatpush1.msra.mxu0 %v326
    %328 = vmatprep.subr.mxu0 0.0
    %v329 = vand.u32 %v160, 4294901760
    %v330 = vsub.f32 %v160, %v329
    %v331 = vand.u32 %v330, 4294901760
    %v332 = vsub.f32 %v330, %v331
    %v333 = vand.u32 %v332, 4294901760
    %334 = vmatpush1.msra.mxu0 %v333
    %335 = vmatprep.subr.mxu0 0.0
    %v336 = vand.u32 %v161, 4294901760
    %v337 = vsub.f32 %v161, %v336
    %v338 = vand.u32 %v337, 4294901760
    %v339 = vsub.f32 %v337, %v338
    %v340 = vand.u32 %v339, 4294901760
    %341 = vmatpush1.msra.mxu0 %v340
    %342 = vmatprep.subr.mxu0 0.0
    %v343 = vand.u32 %v162, 4294901760
    %v344 = vsub.f32 %v162, %v343
    %v345 = vand.u32 %v344, 4294901760
    %v346 = vsub.f32 %v344, %v345
    %v347 = vand.u32 %v346, 4294901760
    %348 = vmatpush1.msra.mxu0 %v347
    %349 = vmatprep.subr.mxu0 0.0
    %v350 = vand.u32 %v163, 4294901760
    %v351 = vsub.f32 %v163, %v350
    %v352 = vand.u32 %v351, 4294901760
    %v353 = vsub.f32 %v351, %v352
    %v354 = vand.u32 %v353, 4294901760
    %355 = vmatpush1.msra.mxu0 %v354
    %356 = vmatprep.subr.mxu0 0.0
    %v357 = vand.u32 %v164, 4294901760
    %v358 = vsub.f32 %v164, %v357
    %v359 = vand.u32 %v358, 4294901760
    %v360 = vsub.f32 %v358, %v359
    %v361 = vand.u32 %v360, 4294901760
    %362 = vmatpush1.msra.mxu0 %v361
    %363 = vmatprep.subr.mxu0 0.0
    %v364 = vand.u32 %v165, 4294901760
    %v365 = vsub.f32 %v165, %v364
    %v366 = vand.u32 %v365, 4294901760
    %v367 = vsub.f32 %v365, %v366
    %v368 = vand.u32 %v367, 4294901760
    %369 = vmatpush1.msra.mxu0 %v368
    %370 = vmatprep.subr.mxu0 0.0
    %371 = vmatpush1.msra.mxu0 0.0
    %372 = vmatprep.subr.mxu0 0.0
    %373 = vmatpush1.msra.mxu0 0.0
    %374 = vmatprep.subr.mxu0 0.0
    %375 = vmatpush1.msra.mxu0 0.0
    %376 = vmatprep.subr.mxu0 0.0
    %377 = vmatpush1.msra.mxu0 0.0
    %378 = vmatprep.subr.mxu0 0.0
    %379 = vmatpush1.msra.mxu0 0.0
    %380 = vmatprep.subr.mxu0 0.0
    %381 = vmatpush1.msra.mxu0 0.0
    %382 = vmatprep.subr.mxu0 0.0
    %383 = vmatpush1.msra.mxu0 0.0
    %384 = vmatprep.subr.mxu0 0.0
    %385 = vmatpush1.msra.mxu0 0.0
    %386 = vmatprep.subr.mxu0 0.0
    %387 = vmatpush1.msra.mxu0 0.0
    %388 = vmatprep.subr.mxu0 0.0
    %389 = vmatpush1.msra.mxu0 0.0
    %390 = vmatprep.subr.mxu0 0.0
    %391 = vmatpush1.msra.mxu0 0.0
    %392 = vmatprep.subr.mxu0 0.0
    %393 = vmatpush1.msra.mxu0 0.0
    %394 = vmatprep.subr.mxu0 0.0
    %395 = vmatpush1.msra.mxu0 0.0
    %396 = vmatprep.subr.mxu0 0.0
    %397 = vmatpush1.msra.mxu0 0.0
    %398 = vmatprep.subr.mxu0 0.0
    %399 = vmatpush1.msra.mxu0 0.0
    %400 = vmatprep.subr.mxu0 0.0
    %401 = vmatpush1.msra.mxu0 0.0
    %402 = vmatprep.mubr.f32.mxu0 0.0
    %v403 = vand.u32 %v166, 4294901760
    %404 = vmatmul.mubr.f32.gmra.mrb[0].mxu0 %v403
    %v405 = vpop.f32.mrb[0].mxu0
    %v406 = vadd.f32 %v255, %v405
    %v407 = vpop.f32.mrb[0].mxu0
    %408 = vdwg.mxu0
    %409 = vmatprep.subr.mxu0 0.0
    %v410 = vand.u32 %v150, 4294901760
    %v411 = vsub.f32 %v150, %v410
    %412 = vmatpush1.msra.mxu0 %v411
    %413 = vmatprep.subr.mxu0 0.0
    %v414 = vand.u32 %v151, 4294901760
    %v415 = vsub.f32 %v151, %v414
    %416 = vmatpush1.msra.mxu0 %v415
    %417 = vmatprep.subr.mxu0 0.0
    %v418 = vand.u32 %v152, 4294901760
    %v419 = vsub.f32 %v152, %v418
    %420 = vmatpush1.msra.mxu0 %v419
    %421 = vmatprep.subr.mxu0 0.0
    %v422 = vand.u32 %v153, 4294901760
    %v423 = vsub.f32 %v153, %v422
    %424 = vmatpush1.msra.mxu0 %v423
    %425 = vmatprep.subr.mxu0 0.0
    %v426 = vand.u32 %v154, 4294901760
    %v427 = vsub.f32 %v154, %v426
    %428 = vmatpush1.msra.mxu0 %v427
    %429 = vmatprep.subr.mxu0 0.0
    %v430 = vand.u32 %v155, 4294901760
    %v431 = vsub.f32 %v155, %v430
    %432 = vmatpush1.msra.mxu0 %v431
    %433 = vmatprep.subr.mxu0 0.0
    %v434 = vand.u32 %v156, 4294901760
    %v435 = vsub.f32 %v156, %v434
    %436 = vmatpush1.msra.mxu0 %v435
    %437 = vmatprep.subr.mxu0 0.0
    %v438 = vand.u32 %v157, 4294901760
    %v439 = vsub.f32 %v157, %v438
    %440 = vmatpush1.msra.mxu0 %v439
    %441 = vmatprep.subr.mxu0 0.0
    %v442 = vand.u32 %v158, 4294901760
    %v443 = vsub.f32 %v158, %v442
    %444 = vmatpush1.msra.mxu0 %v443
    %445 = vmatprep.subr.mxu0 0.0
    %v446 = vand.u32 %v159, 4294901760
    %v447 = vsub.f32 %v159, %v446
    %448 = vmatpush1.msra.mxu0 %v447
    %449 = vmatprep.subr.mxu0 0.0
    %v450 = vand.u32 %v160, 4294901760
    %v451 = vsub.f32 %v160, %v450
    %452 = vmatpush1.msra.mxu0 %v451
    %453 = vmatprep.subr.mxu0 0.0
    %v454 = vand.u32 %v161, 4294901760
    %v455 = vsub.f32 %v161, %v454
    %456 = vmatpush1.msra.mxu0 %v455
    %457 = vmatprep.subr.mxu0 0.0
    %v458 = vand.u32 %v162, 4294901760
    %v459 = vsub.f32 %v162, %v458
    %460 = vmatpush1.msra.mxu0 %v459
    %461 = vmatprep.subr.mxu0 0.0
    %v462 = vand.u32 %v163, 4294901760
    %v463 = vsub.f32 %v163, %v462
    %464 = vmatpush1.msra.mxu0 %v463
    %465 = vmatprep.subr.mxu0 0.0
    %v466 = vand.u32 %v164, 4294901760
    %v467 = vsub.f32 %v164, %v466
    %468 = vmatpush1.msra.mxu0 %v467
    %469 = vmatprep.subr.mxu0 0.0
    %v470 = vand.u32 %v165, 4294901760
    %v471 = vsub.f32 %v165, %v470
    %472 = vmatpush1.msra.mxu0 %v471
    %473 = vmatprep.subr.mxu0 0.0
    %474 = vmatpush1.msra.mxu0 0.0
    %475 = vmatprep.subr.mxu0 0.0
    %476 = vmatpush1.msra.mxu0 0.0
    %477 = vmatprep.subr.mxu0 0.0
    %478 = vmatpush1.msra.mxu0 0.0
    %479 = vmatprep.subr.mxu0 0.0
    %480 = vmatpush1.msra.mxu0 0.0
    %481 = vmatprep.subr.mxu0 0.0
    %482 = vmatpush1.msra.mxu0 0.0
    %483 = vmatprep.subr.mxu0 0.0
    %484 = vmatpush1.msra.mxu0 0.0
    %485 = vmatprep.subr.mxu0 0.0
    %486 = vmatpush1.msra.mxu0 0.0
    %487 = vmatprep.subr.mxu0 0.0
    %488 = vmatpush1.msra.mxu0 0.0
    %489 = vmatprep.subr.mxu0 0.0
    %490 = vmatpush1.msra.mxu0 0.0
    %491 = vmatprep.subr.mxu0 0.0
    %492 = vmatpush1.msra.mxu0 0.0
    %493 = vmatprep.subr.mxu0 0.0
    %494 = vmatpush1.msra.mxu0 0.0
    %495 = vmatprep.subr.mxu0 0.0
    %496 = vmatpush1.msra.mxu0 0.0
    %497 = vmatprep.subr.mxu0 0.0
    %498 = vmatpush1.msra.mxu0 0.0
    %499 = vmatprep.subr.mxu0 0.0
    %500 = vmatpush1.msra.mxu0 0.0
    %501 = vmatprep.subr.mxu0 0.0
    %502 = vmatpush1.msra.mxu0 0.0
    %503 = vmatprep.subr.mxu0 0.0
    %504 = vmatpush1.msra.mxu0 0.0
    %505 = vmatprep.mubr.f32.mxu0 0.0
    %v506 = vand.u32 %v166, 4294901760
    %v507 = vsub.f32 %v166, %v506
    %508 = vmatmul.mubr.f32.gmra.mrb[0].mxu0 %v507
    %v509 = vpop.f32.mrb[0].mxu0
    %v510 = vadd.f32 %v406, %v509
    %v511 = vpop.f32.mrb[0].mxu0
    %512 = vdwg.mxu0
    %513 = vmatprep.subr.mxu0 0.0
    %v514 = vand.u32 %v150, 4294901760
    %515 = vmatpush1.msra.mxu0 %v514
    %516 = vmatprep.subr.mxu0 0.0
    %v517 = vand.u32 %v151, 4294901760
    %518 = vmatpush1.msra.mxu0 %v517
    %519 = vmatprep.subr.mxu0 0.0
    %v520 = vand.u32 %v152, 4294901760
    %521 = vmatpush1.msra.mxu0 %v520
    %522 = vmatprep.subr.mxu0 0.0
    %v523 = vand.u32 %v153, 4294901760
    %524 = vmatpush1.msra.mxu0 %v523
    %525 = vmatprep.subr.mxu0 0.0
    %v526 = vand.u32 %v154, 4294901760
    %527 = vmatpush1.msra.mxu0 %v526
    %528 = vmatprep.subr.mxu0 0.0
    %v529 = vand.u32 %v155, 4294901760
    %530 = vmatpush1.msra.mxu0 %v529
    %531 = vmatprep.subr.mxu0 0.0
    %v532 = vand.u32 %v156, 4294901760
    %533 = vmatpush1.msra.mxu0 %v532
    %534 = vmatprep.subr.mxu0 0.0
    %v535 = vand.u32 %v157, 4294901760
    %536 = vmatpush1.msra.mxu0 %v535
    %537 = vmatprep.subr.mxu0 0.0
    %v538 = vand.u32 %v158, 4294901760
    %539 = vmatpush1.msra.mxu0 %v538
    %540 = vmatprep.subr.mxu0 0.0
    %v541 = vand.u32 %v159, 4294901760
    %542 = vmatpush1.msra.mxu0 %v541
    %543 = vmatprep.subr.mxu0 0.0
    %v544 = vand.u32 %v160, 4294901760
    %545 = vmatpush1.msra.mxu0 %v544
    %546 = vmatprep.subr.mxu0 0.0
    %v547 = vand.u32 %v161, 4294901760
    %548 = vmatpush1.msra.mxu0 %v547
    %549 = vmatprep.subr.mxu0 0.0
    %v550 = vand.u32 %v162, 4294901760
    %551 = vmatpush1.msra.mxu0 %v550
    %552 = vmatprep.subr.mxu0 0.0
    %v553 = vand.u32 %v163, 4294901760
    %554 = vmatpush1.msra.mxu0 %v553
    %555 = vmatprep.subr.mxu0 0.0
    %v556 = vand.u32 %v164, 4294901760
    %557 = vmatpush1.msra.mxu0 %v556
    %558 = vmatprep.subr.mxu0 0.0
    %v559 = vand.u32 %v165, 4294901760
    %560 = vmatpush1.msra.mxu0 %v559
    %561 = vmatprep.subr.mxu0 0.0
    %562 = vmatpush1.msra.mxu0 0.0
    %563 = vmatprep.subr.mxu0 0.0
    %564 = vmatpush1.msra.mxu0 0.0
    %565 = vmatprep.subr.mxu0 0.0
    %566 = vmatpush1.msra.mxu0 0.0
    %567 = vmatprep.subr.mxu0 0.0
    %568 = vmatpush1.msra.mxu0 0.0
    %569 = vmatprep.subr.mxu0 0.0
    %570 = vmatpush1.msra.mxu0 0.0
    %571 = vmatprep.subr.mxu0 0.0
    %572 = vmatpush1.msra.mxu0 0.0
    %573 = vmatprep.subr.mxu0 0.0
    %574 = vmatpush1.msra.mxu0 0.0
    %575 = vmatprep.subr.mxu0 0.0
    %576 = vmatpush1.msra.mxu0 0.0
    %577 = vmatprep.subr.mxu0 0.0
    %578 = vmatpush1.msra.mxu0 0.0
    %579 = vmatprep.subr.mxu0 0.0
    %580 = vmatpush1.msra.mxu0 0.0
    %581 = vmatprep.subr.mxu0 0.0
    %582 = vmatpush1.msra.mxu0 0.0
    %583 = vmatprep.subr.mxu0 0.0
    %584 = vmatpush1.msra.mxu0 0.0
    %585 = vmatprep.subr.mxu0 0.0
    %586 = vmatpush1.msra.mxu0 0.0
    %587 = vmatprep.subr.mxu0 0.0
    %588 = vmatpush1.msra.mxu0 0.0
    %589 = vmatprep.subr.mxu0 0.0
    %590 = vmatpush1.msra.mxu0 0.0
    %591 = vmatprep.subr.mxu0 0.0
    %592 = vmatpush1.msra.mxu0 0.0
    %593 = vmatprep.mubr.f32.mxu0 0.0
    %v594 = vand.u32 %v166, 4294901760
    %v595 = vsub.f32 %v166, %v594
    %v596 = vand.u32 %v595, 4294901760
    %597 = vmatmul.mubr.f32.gmra.mrb[0].mxu0 %v596
    %v598 = vpop.f32.mrb[0].mxu0
    %v599 = vadd.f32 %v510, %v598
    %v600 = vpop.f32.mrb[0].mxu0
    %601 = vdwg.mxu0
    %602 = vmatprep.subr.mxu0 0.0
    %v603 = vand.u32 %v150, 4294901760
    %v604 = vsub.f32 %v150, %v603
    %v605 = vand.u32 %v604, 4294901760
    %606 = vmatpush1.msra.mxu0 %v605
    %607 = vmatprep.subr.mxu0 0.0
    %v608 = vand.u32 %v151, 4294901760
    %v609 = vsub.f32 %v151, %v608
    %v610 = vand.u32 %v609, 4294901760
    %611 = vmatpush1.msra.mxu0 %v610
    %612 = vmatprep.subr.mxu0 0.0
    %v613 = vand.u32 %v152, 4294901760
    %v614 = vsub.f32 %v152, %v613
    %v615 = vand.u32 %v614, 4294901760
    %616 = vmatpush1.msra.mxu0 %v615
    %617 = vmatprep.subr.mxu0 0.0
    %v618 = vand.u32 %v153, 4294901760
    %v619 = vsub.f32 %v153, %v618
    %v620 = vand.u32 %v619, 4294901760
    %621 = vmatpush1.msra.mxu0 %v620
    %622 = vmatprep.subr.mxu0 0.0
    %v623 = vand.u32 %v154, 4294901760
    %v624 = vsub.f32 %v154, %v623
    %v625 = vand.u32 %v624, 4294901760
    %626 = vmatpush1.msra.mxu0 %v625
    %627 = vmatprep.subr.mxu0 0.0
    %v628 = vand.u32 %v155, 4294901760
    %v629 = vsub.f32 %v155, %v628
    %v630 = vand.u32 %v629, 4294901760
    %631 = vmatpush1.msra.mxu0 %v630
    %632 = vmatprep.subr.mxu0 0.0
    %v633 = vand.u32 %v156, 4294901760
    %v634 = vsub.f32 %v156, %v633
    %v635 = vand.u32 %v634, 4294901760
    %636 = vmatpush1.msra.mxu0 %v635
    %637 = vmatprep.subr.mxu0 0.0
    %v638 = vand.u32 %v157, 4294901760
    %v639 = vsub.f32 %v157, %v638
    %v640 = vand.u32 %v639, 4294901760
    %641 = vmatpush1.msra.mxu0 %v640
    %642 = vmatprep.subr.mxu0 0.0
    %v643 = vand.u32 %v158, 4294901760
    %v644 = vsub.f32 %v158, %v643
    %v645 = vand.u32 %v644, 4294901760
    %646 = vmatpush1.msra.mxu0 %v645
    %647 = vmatprep.subr.mxu0 0.0
    %v648 = vand.u32 %v159, 4294901760
    %v649 = vsub.f32 %v159, %v648
    %v650 = vand.u32 %v649, 4294901760
    %651 = vmatpush1.msra.mxu0 %v650
    %652 = vmatprep.subr.mxu0 0.0
    %v653 = vand.u32 %v160, 4294901760
    %v654 = vsub.f32 %v160, %v653
    %v655 = vand.u32 %v654, 4294901760
    %656 = vmatpush1.msra.mxu0 %v655
    %657 = vmatprep.subr.mxu0 0.0
    %v658 = vand.u32 %v161, 4294901760
    %v659 = vsub.f32 %v161, %v658
    %v660 = vand.u32 %v659, 4294901760
    %661 = vmatpush1.msra.mxu0 %v660
    %662 = vmatprep.subr.mxu0 0.0
    %v663 = vand.u32 %v162, 4294901760
    %v664 = vsub.f32 %v162, %v663
    %v665 = vand.u32 %v664, 4294901760
    %666 = vmatpush1.msra.mxu0 %v665
    %667 = vmatprep.subr.mxu0 0.0
    %v668 = vand.u32 %v163, 4294901760
    %v669 = vsub.f32 %v163, %v668
    %v670 = vand.u32 %v669, 4294901760
    %671 = vmatpush1.msra.mxu0 %v670
    %672 = vmatprep.subr.mxu0 0.0
    %v673 = vand.u32 %v164, 4294901760
    %v674 = vsub.f32 %v164, %v673
    %v675 = vand.u32 %v674, 4294901760
    %676 = vmatpush1.msra.mxu0 %v675
    %677 = vmatprep.subr.mxu0 0.0
    %v678 = vand.u32 %v165, 4294901760
    %v679 = vsub.f32 %v165, %v678
    %v680 = vand.u32 %v679, 4294901760
    %681 = vmatpush1.msra.mxu0 %v680
    %682 = vmatprep.subr.mxu0 0.0
    %683 = vmatpush1.msra.mxu0 0.0
    %684 = vmatprep.subr.mxu0 0.0
    %685 = vmatpush1.msra.mxu0 0.0
    %686 = vmatprep.subr.mxu0 0.0
    %687 = vmatpush1.msra.mxu0 0.0
    %688 = vmatprep.subr.mxu0 0.0
    %689 = vmatpush1.msra.mxu0 0.0
    %690 = vmatprep.subr.mxu0 0.0
    %691 = vmatpush1.msra.mxu0 0.0
    %692 = vmatprep.subr.mxu0 0.0
    %693 = vmatpush1.msra.mxu0 0.0
    %694 = vmatprep.subr.mxu0 0.0
    %695 = vmatpush1.msra.mxu0 0.0
    %696 = vmatprep.subr.mxu0 0.0
    %697 = vmatpush1.msra.mxu0 0.0
    %698 = vmatprep.subr.mxu0 0.0
    %699 = vmatpush1.msra.mxu0 0.0
    %700 = vmatprep.subr.mxu0 0.0
    %701 = vmatpush1.msra.mxu0 0.0
    %702 = vmatprep.subr.mxu0 0.0
    %703 = vmatpush1.msra.mxu0 0.0
    %704 = vmatprep.subr.mxu0 0.0
    %705 = vmatpush1.msra.mxu0 0.0
    %706 = vmatprep.subr.mxu0 0.0
    %707 = vmatpush1.msra.mxu0 0.0
    %708 = vmatprep.subr.mxu0 0.0
    %709 = vmatpush1.msra.mxu0 0.0
    %710 = vmatprep.subr.mxu0 0.0
    %711 = vmatpush1.msra.mxu0 0.0
    %712 = vmatprep.subr.mxu0 0.0
    %713 = vmatpush1.msra.mxu0 0.0
    %714 = vmatprep.mubr.f32.mxu0 0.0
    %v715 = vand.u32 %v166, 4294901760
    %716 = vmatmul.mubr.f32.gmra.mrb[0].mxu0 %v715
    %v717 = vpop.f32.mrb[0].mxu0
    %v718 = vadd.f32 %v599, %v717
    %v719 = vpop.f32.mrb[0].mxu0
    %720 = vdwg.mxu0
    %721 = vmatprep.subr.mxu0 0.0
    %v722 = vand.u32 %v150, 4294901760
    %723 = vmatpush1.msra.mxu0 %v722
    %724 = vmatprep.subr.mxu0 0.0
    %v725 = vand.u32 %v151, 4294901760
    %726 = vmatpush1.msra.mxu0 %v725
    %727 = vmatprep.subr.mxu0 0.0
    %v728 = vand.u32 %v152, 4294901760
    %729 = vmatpush1.msra.mxu0 %v728
    %730 = vmatprep.subr.mxu0 0.0
    %v731 = vand.u32 %v153, 4294901760
    %732 = vmatpush1.msra.mxu0 %v731
    %733 = vmatprep.subr.mxu0 0.0
    %v734 = vand.u32 %v154, 4294901760
    %735 = vmatpush1.msra.mxu0 %v734
    %736 = vmatprep.subr.mxu0 0.0
    %v737 = vand.u32 %v155, 4294901760
    %738 = vmatpush1.msra.mxu0 %v737
    %739 = vmatprep.subr.mxu0 0.0
    %v740 = vand.u32 %v156, 4294901760
    %741 = vmatpush1.msra.mxu0 %v740
    %742 = vmatprep.subr.mxu0 0.0
    %v743 = vand.u32 %v157, 4294901760
    %744 = vmatpush1.msra.mxu0 %v743
    %745 = vmatprep.subr.mxu0 0.0
    %v746 = vand.u32 %v158, 4294901760
    %747 = vmatpush1.msra.mxu0 %v746
    %748 = vmatprep.subr.mxu0 0.0
    %v749 = vand.u32 %v159, 4294901760
    %750 = vmatpush1.msra.mxu0 %v749
    %751 = vmatprep.subr.mxu0 0.0
    %v752 = vand.u32 %v160, 4294901760
    %753 = vmatpush1.msra.mxu0 %v752
    %754 = vmatprep.subr.mxu0 0.0
    %v755 = vand.u32 %v161, 4294901760
    %756 = vmatpush1.msra.mxu0 %v755
    %757 = vmatprep.subr.mxu0 0.0
    %v758 = vand.u32 %v162, 4294901760
    %759 = vmatpush1.msra.mxu0 %v758
    %760 = vmatprep.subr.mxu0 0.0
    %v761 = vand.u32 %v163, 4294901760
    %762 = vmatpush1.msra.mxu0 %v761
    %763 = vmatprep.subr.mxu0 0.0
    %v764 = vand.u32 %v164, 4294901760
    %765 = vmatpush1.msra.mxu0 %v764
    %766 = vmatprep.subr.mxu0 0.0
    %v767 = vand.u32 %v165, 4294901760
    %768 = vmatpush1.msra.mxu0 %v767
    %769 = vmatprep.subr.mxu0 0.0
    %770 = vmatpush1.msra.mxu0 0.0
    %771 = vmatprep.subr.mxu0 0.0
    %772 = vmatpush1.msra.mxu0 0.0
    %773 = vmatprep.subr.mxu0 0.0
    %774 = vmatpush1.msra.mxu0 0.0
    %775 = vmatprep.subr.mxu0 0.0
    %776 = vmatpush1.msra.mxu0 0.0
    %777 = vmatprep.subr.mxu0 0.0
    %778 = vmatpush1.msra.mxu0 0.0
    %779 = vmatprep.subr.mxu0 0.0
    %780 = vmatpush1.msra.mxu0 0.0
    %781 = vmatprep.subr.mxu0 0.0
    %782 = vmatpush1.msra.mxu0 0.0
    %783 = vmatprep.subr.mxu0 0.0
    %784 = vmatpush1.msra.mxu0 0.0
    %785 = vmatprep.subr.mxu0 0.0
    %786 = vmatpush1.msra.mxu0 0.0
    %787 = vmatprep.subr.mxu0 0.0
    %788 = vmatpush1.msra.mxu0 0.0
    %789 = vmatprep.subr.mxu0 0.0
    %790 = vmatpush1.msra.mxu0 0.0
    %791 = vmatprep.subr.mxu0 0.0
    %792 = vmatpush1.msra.mxu0 0.0
    %793 = vmatprep.subr.mxu0 0.0
    %794 = vmatpush1.msra.mxu0 0.0
    %795 = vmatprep.subr.mxu0 0.0
    %796 = vmatpush1.msra.mxu0 0.0
    %797 = vmatprep.subr.mxu0 0.0
    %798 = vmatpush1.msra.mxu0 0.0
    %799 = vmatprep.subr.mxu0 0.0
    %800 = vmatpush1.msra.mxu0 0.0
    %801 = vmatprep.mubr.f32.mxu0 0.0
    %v802 = vand.u32 %v166, 4294901760
    %803 = vmatmul.mubr.f32.gmra.mrb[0].mxu0 %v802
    %v804 = vpop.f32.mrb[0].mxu0
    %v805 = vadd.f32 %v718, %v804
    %v806 = vpop.f32.mrb[0].mxu0
    %807 = vdwg.mxu0
    %v808 = vld [vmem:[#allocation3] sm:$0xff]
    %v809 = vld [vmem:[%s4] sm:$0xff]
    %v810 = vld [vmem:[%s4 + $0x8] sm:$0xff]
    %v811 = vld [vmem:[%s4 + $0x10] sm:$0xff]
    %v812 = vld [vmem:[%s4 + $0x18] sm:$0xff]
    %v813 = vld [vmem:[%s4 + $0x20] sm:$0xff]
    %v814 = vld [vmem:[%s4 + $0x28] sm:$0xff]
    %v815 = vld [vmem:[%s4 + $0x30] sm:$0xff]
    %v816 = vld [vmem:[%s4 + $0x38] sm:$0xff]
    %vm817 = vcmask 523264
    %v819 = vsel %vm817, %v805, 0
    %821 = vmatprep.subr.mxu0 0.0
    %v822 = vand.u32 %v809, 4294901760
    %823 = vmatpush1.msra.mxu0 %v822
    %824 = vmatprep.subr.mxu0 0.0
    %v825 = vand.u32 %v810, 4294901760
    %826 = vmatpush1.msra.mxu0 %v825
    %827 = vmatprep.subr.mxu0 0.0
    %v828 = vand.u32 %v811, 4294901760
    %829 = vmatpush1.msra.mxu0 %v828
    %830 = vmatprep.subr.mxu0 0.0
    %v831 = vand.u32 %v812, 4294901760
    %832 = vmatpush1.msra.mxu0 %v831
    %833 = vmatprep.subr.mxu0 0.0
    %v834 = vand.u32 %v813, 4294901760
    %835 = vmatpush1.msra.mxu0 %v834
    %836 = vmatprep.subr.mxu0 0.0
    %v837 = vand.u32 %v814, 4294901760
    %838 = vmatpush1.msra.mxu0 %v837
    %839 = vmatprep.subr.mxu0 0.0
    %v840 = vand.u32 %v815, 4294901760
    %841 = vmatpush1.msra.mxu0 %v840
    %842 = vmatprep.subr.mxu0 0.0
    %v843 = vand.u32 %v816, 4294901760
    %844 = vmatpush1.msra.mxu0 %v843
    %845 = vmatprep.subr.mxu0 0.0
    %846 = vmatpush1.msra.mxu0 0.0
    %847 = vmatprep.subr.mxu0 0.0
    %848 = vmatpush1.msra.mxu0 0.0
    %849 = vmatprep.subr.mxu0 0.0
    %850 = vmatpush1.msra.mxu0 0.0
    %851 = vmatprep.subr.mxu0 0.0
    %852 = vmatpush1.msra.mxu0 0.0
    %853 = vmatprep.subr.mxu0 0.0
    %854 = vmatpush1.msra.mxu0 0.0
    %855 = vmatprep.subr.mxu0 0.0
    %856 = vmatpush1.msra.mxu0 0.0
    %857 = vmatprep.subr.mxu0 0.0
    %858 = vmatpush1.msra.mxu0 0.0
    %859 = vmatprep.subr.mxu0 0.0
    %860 = vmatpush1.msra.mxu0 0.0
    %861 = vmatprep.subr.mxu0 0.0
    %862 = vmatpush1.msra.mxu0 0.0
    %863 = vmatprep.subr.mxu0 0.0
    %864 = vmatpush1.msra.mxu0 0.0
    %865 = vmatprep.subr.mxu0 0.0
    %866 = vmatpush1.msra.mxu0 0.0
    %867 = vmatprep.subr.mxu0 0.0
    %868 = vmatpush1.msra.mxu0 0.0
    %869 = vmatprep.subr.mxu0 0.0
    %870 = vmatpush1.msra.mxu0 0.0
    %871 = vmatprep.subr.mxu0 0.0
    %872 = vmatpush1.msra.mxu0 0.0
    %873 = vmatprep.subr.mxu0 0.0
    %874 = vmatpush1.msra.mxu0 0.0
    %875 = vmatprep.subr.mxu0 0.0
    %876 = vmatpush1.msra.mxu0 0.0
    %877 = vmatprep.subr.mxu0 0.0
    %878 = vmatpush1.msra.mxu0 0.0
    %879 = vmatprep.subr.mxu0 0.0
    %880 = vmatpush1.msra.mxu0 0.0
    %881 = vmatprep.subr.mxu0 0.0
    %882 = vmatpush1.msra.mxu0 0.0
    %883 = vmatprep.subr.mxu0 0.0
    %884 = vmatpush1.msra.mxu0 0.0
    %885 = vmatprep.subr.mxu0 0.0
    %886 = vmatpush1.msra.mxu0 0.0
    %887 = vmatprep.subr.mxu0 0.0
    %888 = vmatpush1.msra.mxu0 0.0
    %889 = vmatprep.subr.mxu0 0.0
    %890 = vmatpush1.msra.mxu0 0.0
    %891 = vmatprep.subr.mxu0 0.0
    %892 = vmatpush1.msra.mxu0 0.0
    %893 = vmatprep.mubr.f32.mxu0 0.0
    %v894 = vand.u32 %v819, 4294901760
    %v895 = vsub.f32 %v819, %v894
    %v896 = vand.u32 %v895, 4294901760
    %v897 = vsub.f32 %v895, %v896
    %v898 = vand.u32 %v897, 4294901760
    %899 = vmatmul.mubr.f32.gmra.mrb[0].mxu0 %v898
    %v900 = vpop.f32.mrb[0].mxu0
    %v901 = vadd.f32 0.0, %v900
    %v902 = vpop.f32.mrb[0].mxu0
    %903 = vdwg.mxu0
    %904 = vmatprep.subr.mxu0 0.0
    %v905 = vand.u32 %v809, 4294901760
    %v906 = vsub.f32 %v809, %v905
    %v907 = vand.u32 %v906, 4294901760
    %v908 = vsub.f32 %v906, %v907
    %v909 = vand.u32 %v908, 4294901760
    %910 = vmatpush1.msra.mxu0 %v909
    %911 = vmatprep.subr.mxu0 0.0
    %v912 = vand.u32 %v810, 4294901760
    %v913 = vsub.f32 %v810, %v912
    %v914 = vand.u32 %v913, 4294901760
    %v915 = vsub.f32 %v913, %v914
    %v916 = vand.u32 %v915, 4294901760
    %917 = vmatpush1.msra.mxu0 %v916
    %918 = vmatprep.subr.mxu0 0.0
    %v919 = vand.u32 %v811, 4294901760
    %v920 = vsub.f32 %v811, %v919
    %v921 = vand.u32 %v920, 4294901760
    %v922 = vsub.f32 %v920, %v921
    %v923 = vand.u32 %v922, 4294901760
    %924 = vmatpush1.msra.mxu0 %v923
    %925 = vmatprep.subr.mxu0 0.0
    %v926 = vand.u32 %v812, 4294901760
    %v927 = vsub.f32 %v812, %v926
    %v928 = vand.u32 %v927, 4294901760
    %v929 = vsub.f32 %v927, %v928
    %v930 = vand.u32 %v929, 4294901760
    %931 = vmatpush1.msra.mxu0 %v930
    %932 = vmatprep.subr.mxu0 0.0
    %v933 = vand.u32 %v813, 4294901760
    %v934 = vsub.f32 %v813, %v933
    %v935 = vand.u32 %v934, 4294901760
    %v936 = vsub.f32 %v934, %v935
    %v937 = vand.u32 %v936, 4294901760
    %938 = vmatpush1.msra.mxu0 %v937
    %939 = vmatprep.subr.mxu0 0.0
    %v940 = vand.u32 %v814, 4294901760
    %v941 = vsub.f32 %v814, %v940
    %v942 = vand.u32 %v941, 4294901760
    %v943 = vsub.f32 %v941, %v942
    %v944 = vand.u32 %v943, 4294901760
    %945 = vmatpush1.msra.mxu0 %v944
    %946 = vmatprep.subr.mxu0 0.0
    %v947 = vand.u32 %v815, 4294901760
    %v948 = vsub.f32 %v815, %v947
    %v949 = vand.u32 %v948, 4294901760
    %v950 = vsub.f32 %v948, %v949
    %v951 = vand.u32 %v950, 4294901760
    %952 = vmatpush1.msra.mxu0 %v951
    %953 = vmatprep.subr.mxu0 0.0
    %v954 = vand.u32 %v816, 4294901760
    %v955 = vsub.f32 %v816, %v954
    %v956 = vand.u32 %v955, 4294901760
    %v957 = vsub.f32 %v955, %v956
    %v958 = vand.u32 %v957, 4294901760
    %959 = vmatpush1.msra.mxu0 %v958
    %960 = vmatprep.subr.mxu0 0.0
    %961 = vmatpush1.msra.mxu0 0.0
    %962 = vmatprep.subr.mxu0 0.0
    %963 = vmatpush1.msra.mxu0 0.0
    %964 = vmatprep.subr.mxu0 0.0
    %965 = vmatpush1.msra.mxu0 0.0
    %966 = vmatprep.subr.mxu0 0.0
    %967 = vmatpush1.msra.mxu0 0.0
    %968 = vmatprep.subr.mxu0 0.0
    %969 = vmatpush1.msra.mxu0 0.0
    %970 = vmatprep.subr.mxu0 0.0
    %971 = vmatpush1.msra.mxu0 0.0
    %972 = vmatprep.subr.mxu0 0.0
    %973 = vmatpush1.msra.mxu0 0.0
    %974 = vmatprep.subr.mxu0 0.0
    %975 = vmatpush1.msra.mxu0 0.0
    %976 = vmatprep.subr.mxu0 0.0
    %977 = vmatpush1.msra.mxu0 0.0
    %978 = vmatprep.subr.mxu0 0.0
    %979 = vmatpush1.msra.mxu0 0.0
    %980 = vmatprep.subr.mxu0 0.0
    %981 = vmatpush1.msra.mxu0 0.0
    %982 = vmatprep.subr.mxu0 0.0
    %983 = vmatpush1.msra.mxu0 0.0
    %984 = vmatprep.subr.mxu0 0.0
    %985 = vmatpush1.msra.mxu0 0.0
    %986 = vmatprep.subr.mxu0 0.0
    %987 = vmatpush1.msra.mxu0 0.0
    %988 = vmatprep.subr.mxu0 0.0
    %989 = vmatpush1.msra.mxu0 0.0
    %990 = vmatprep.subr.mxu0 0.0
    %991 = vmatpush1.msra.mxu0 0.0
    %992 = vmatprep.subr.mxu0 0.0
    %993 = vmatpush1.msra.mxu0 0.0
    %994 = vmatprep.subr.mxu0 0.0
    %995 = vmatpush1.msra.mxu0 0.0
    %996 = vmatprep.subr.mxu0 0.0
    %997 = vmatpush1.msra.mxu0 0.0
    %998 = vmatprep.subr.mxu0 0.0
    %999 = vmatpush1.msra.mxu0 0.0
    %1000 = vmatprep.subr.mxu0 0.0
    %1001 = vmatpush1.msra.mxu0 0.0
    %1002 = vmatprep.subr.mxu0 0.0
    %1003 = vmatpush1.msra.mxu0 0.0
    %1004 = vmatprep.subr.mxu0 0.0
    %1005 = vmatpush1.msra.mxu0 0.0
    %1006 = vmatprep.subr.mxu0 0.0
    %1007 = vmatpush1.msra.mxu0 0.0
    %1008 = vmatprep.mubr.f32.mxu0 0.0
    %v1009 = vand.u32 %v819, 4294901760
    %1010 = vmatmul.mubr.f32.gmra.mrb[0].mxu0 %v1009
    %v1011 = vpop.f32.mrb[0].mxu0
    %v1012 = vadd.f32 %v901, %v1011
    %v1013 = vpop.f32.mrb[0].mxu0
    %1014 = vdwg.mxu0
    %1015 = vmatprep.subr.mxu0 0.0
    %v1016 = vand.u32 %v809, 4294901760
    %v1017 = vsub.f32 %v809, %v1016
    %1018 = vmatpush1.msra.mxu0 %v1017
    %1019 = vmatprep.subr.mxu0 0.0
    %v1020 = vand.u32 %v810, 4294901760
    %v1021 = vsub.f32 %v810, %v1020
    %1022 = vmatpush1.msra.mxu0 %v1021
    %1023 = vmatprep.subr.mxu0 0.0
    %v1024 = vand.u32 %v811, 4294901760
    %v1025 = vsub.f32 %v811, %v1024
    %1026 = vmatpush1.msra.mxu0 %v1025
    %1027 = vmatprep.subr.mxu0 0.0
    %v1028 = vand.u32 %v812, 4294901760
    %v1029 = vsub.f32 %v812, %v1028
    %1030 = vmatpush1.msra.mxu0 %v1029
    %1031 = vmatprep.subr.mxu0 0.0
    %v1032 = vand.u32 %v813, 4294901760
    %v1033 = vsub.f32 %v813, %v1032
    %1034 = vmatpush1.msra.mxu0 %v1033
    %1035 = vmatprep.subr.mxu0 0.0
    %v1036 = vand.u32 %v814, 4294901760
    %v1037 = vsub.f32 %v814, %v1036
    %1038 = vmatpush1.msra.mxu0 %v1037
    %1039 = vmatprep.subr.mxu0 0.0
    %v1040 = vand.u32 %v815, 4294901760
    %v1041 = vsub.f32 %v815, %v1040
    %1042 = vmatpush1.msra.mxu0 %v1041
    %1043 = vmatprep.subr.mxu0 0.0
    %v1044 = vand.u32 %v816, 4294901760
    %v1045 = vsub.f32 %v816, %v1044
    %1046 = vmatpush1.msra.mxu0 %v1045
    %1047 = vmatprep.subr.mxu0 0.0
    %1048 = vmatpush1.msra.mxu0 0.0
    %1049 = vmatprep.subr.mxu0 0.0
    %1050 = vmatpush1.msra.mxu0 0.0
    %1051 = vmatprep.subr.mxu0 0.0
    %1052 = vmatpush1.msra.mxu0 0.0
    %1053 = vmatprep.subr.mxu0 0.0
    %1054 = vmatpush1.msra.mxu0 0.0
    %1055 = vmatprep.subr.mxu0 0.0
    %1056 = vmatpush1.msra.mxu0 0.0
    %1057 = vmatprep.subr.mxu0 0.0
    %1058 = vmatpush1.msra.mxu0 0.0
    %1059 = vmatprep.subr.mxu0 0.0
    %1060 = vmatpush1.msra.mxu0 0.0
    %1061 = vmatprep.subr.mxu0 0.0
    %1062 = vmatpush1.msra.mxu0 0.0
    %1063 = vmatprep.subr.mxu0 0.0
    %1064 = vmatpush1.msra.mxu0 0.0
    %1065 = vmatprep.subr.mxu0 0.0
    %1066 = vmatpush1.msra.mxu0 0.0
    %1067 = vmatprep.subr.mxu0 0.0
    %1068 = vmatpush1.msra.mxu0 0.0
    %1069 = vmatprep.subr.mxu0 0.0
    %1070 = vmatpush1.msra.mxu0 0.0
    %1071 = vmatprep.subr.mxu0 0.0
    %1072 = vmatpush1.msra.mxu0 0.0
    %1073 = vmatprep.subr.mxu0 0.0
    %1074 = vmatpush1.msra.mxu0 0.0
    %1075 = vmatprep.subr.mxu0 0.0
    %1076 = vmatpush1.msra.mxu0 0.0
    %1077 = vmatprep.subr.mxu0 0.0
    %1078 = vmatpush1.msra.mxu0 0.0
    %1079 = vmatprep.subr.mxu0 0.0
    %1080 = vmatpush1.msra.mxu0 0.0
    %1081 = vmatprep.subr.mxu0 0.0
    %1082 = vmatpush1.msra.mxu0 0.0
    %1083 = vmatprep.subr.mxu0 0.0
    %1084 = vmatpush1.msra.mxu0 0.0
    %1085 = vmatprep.subr.mxu0 0.0
    %1086 = vmatpush1.msra.mxu0 0.0
    %1087 = vmatprep.subr.mxu0 0.0
    %1088 = vmatpush1.msra.mxu0 0.0
    %1089 = vmatprep.subr.mxu0 0.0
    %1090 = vmatpush1.msra.mxu0 0.0
    %1091 = vmatprep.subr.mxu0 0.0
    %1092 = vmatpush1.msra.mxu0 0.0
    %1093 = vmatprep.subr.mxu0 0.0
    %1094 = vmatpush1.msra.mxu0 0.0
    %1095 = vmatprep.mubr.f32.mxu0 0.0
    %v1096 = vand.u32 %v819, 4294901760
    %v1097 = vsub.f32 %v819, %v1096
    %1098 = vmatmul.mubr.f32.gmra.mrb[0].mxu0 %v1097
    %v1099 = vpop.f32.mrb[0].mxu0
    %v1100 = vadd.f32 %v1012, %v1099
    %v1101 = vpop.f32.mrb[0].mxu0
    %1102 = vdwg.mxu0
    %1103 = vmatprep.subr.mxu0 0.0
    %v1104 = vand.u32 %v809, 4294901760
    %1105 = vmatpush1.msra.mxu0 %v1104
    %1106 = vmatprep.subr.mxu0 0.0
    %v1107 = vand.u32 %v810, 4294901760
    %1108 = vmatpush1.msra.mxu0 %v1107
    %1109 = vmatprep.subr.mxu0 0.0
    %v1110 = vand.u32 %v811, 4294901760
    %1111 = vmatpush1.msra.mxu0 %v1110
    %1112 = vmatprep.subr.mxu0 0.0
    %v1113 = vand.u32 %v812, 4294901760
    %1114 = vmatpush1.msra.mxu0 %v1113
    %1115 = vmatprep.subr.mxu0 0.0
    %v1116 = vand.u32 %v813, 4294901760
    %1117 = vmatpush1.msra.mxu0 %v1116
    %1118 = vmatprep.subr.mxu0 0.0
    %v1119 = vand.u32 %v814, 4294901760
    %1120 = vmatpush1.msra.mxu0 %v1119
    %1121 = vmatprep.subr.mxu0 0.0
    %v1122 = vand.u32 %v815, 4294901760
    %1123 = vmatpush1.msra.mxu0 %v1122
    %1124 = vmatprep.subr.mxu0 0.0
    %v1125 = vand.u32 %v816, 4294901760
    %1126 = vmatpush1.msra.mxu0 %v1125
    %1127 = vmatprep.subr.mxu0 0.0
    %1128 = vmatpush1.msra.mxu0 0.0
    %1129 = vmatprep.subr.mxu0 0.0
    %1130 = vmatpush1.msra.mxu0 0.0
    %1131 = vmatprep.subr.mxu0 0.0
    %1132 = vmatpush1.msra.mxu0 0.0
    %1133 = vmatprep.subr.mxu0 0.0
    %1134 = vmatpush1.msra.mxu0 0.0
    %1135 = vmatprep.subr.mxu0 0.0
    %1136 = vmatpush1.msra.mxu0 0.0
    %1137 = vmatprep.subr.mxu0 0.0
    %1138 = vmatpush1.msra.mxu0 0.0
    %1139 = vmatprep.subr.mxu0 0.0
    %1140 = vmatpush1.msra.mxu0 0.0
    %1141 = vmatprep.subr.mxu0 0.0
    %1142 = vmatpush1.msra.mxu0 0.0
    %1143 = vmatprep.subr.mxu0 0.0
    %1144 = vmatpush1.msra.mxu0 0.0
    %1145 = vmatprep.subr.mxu0 0.0
    %1146 = vmatpush1.msra.mxu0 0.0
    %1147 = vmatprep.subr.mxu0 0.0
    %1148 = vmatpush1.msra.mxu0 0.0
    %1149 = vmatprep.subr.mxu0 0.0
    %1150 = vmatpush1.msra.mxu0 0.0
    %1151 = vmatprep.subr.mxu0 0.0
    %1152 = vmatpush1.msra.mxu0 0.0
    %1153 = vmatprep.subr.mxu0 0.0
    %1154 = vmatpush1.msra.mxu0 0.0
    %1155 = vmatprep.subr.mxu0 0.0
    %1156 = vmatpush1.msra.mxu0 0.0
    %1157 = vmatprep.subr.mxu0 0.0
    %1158 = vmatpush1.msra.mxu0 0.0
    %1159 = vmatprep.subr.mxu0 0.0
    %1160 = vmatpush1.msra.mxu0 0.0
    %1161 = vmatprep.subr.mxu0 0.0
    %1162 = vmatpush1.msra.mxu0 0.0
    %1163 = vmatprep.subr.mxu0 0.0
    %1164 = vmatpush1.msra.mxu0 0.0
    %1165 = vmatprep.subr.mxu0 0.0
    %1166 = vmatpush1.msra.mxu0 0.0
    %1167 = vmatprep.subr.mxu0 0.0
    %1168 = vmatpush1.msra.mxu0 0.0
    %1169 = vmatprep.subr.mxu0 0.0
    %1170 = vmatpush1.msra.mxu0 0.0
    %1171 = vmatprep.subr.mxu0 0.0
    %1172 = vmatpush1.msra.mxu0 0.0
    %1173 = vmatprep.subr.mxu0 0.0
    %1174 = vmatpush1.msra.mxu0 0.0
    %1175 = vmatprep.mubr.f32.mxu0 0.0
    %v1176 = vand.u32 %v819, 4294901760
    %v1177 = vsub.f32 %v819, %v1176
    %v1178 = vand.u32 %v1177, 4294901760
    %1179 = vmatmul.mubr.f32.gmra.mrb[0].mxu0 %v1178
    %v1180 = vpop.f32.mrb[0].mxu0
    %v1181 = vadd.f32 %v1100, %v1180
    %v1182 = vpop.f32.mrb[0].mxu0
    %1183 = vdwg.mxu0
    %1184 = vmatprep.subr.mxu0 0.0
    %v1185 = vand.u32 %v809, 4294901760
    %v1186 = vsub.f32 %v809, %v1185
    %v1187 = vand.u32 %v1186, 4294901760
    %1188 = vmatpush1.msra.mxu0 %v1187
    %1189 = vmatprep.subr.mxu0 0.0
    %v1190 = vand.u32 %v810, 4294901760
    %v1191 = vsub.f32 %v810, %v1190
    %v1192 = vand.u32 %v1191, 4294901760
    %1193 = vmatpush1.msra.mxu0 %v1192
    %1194 = vmatprep.subr.mxu0 0.0
    %v1195 = vand.u32 %v811, 4294901760
    %v1196 = vsub.f32 %v811, %v1195
    %v1197 = vand.u32 %v1196, 4294901760
    %1198 = vmatpush1.msra.mxu0 %v1197
    %1199 = vmatprep.subr.mxu0 0.0
    %v1200 = vand.u32 %v812, 4294901760
    %v1201 = vsub.f32 %v812, %v1200
    %v1202 = vand.u32 %v1201, 4294901760
    %1203 = vmatpush1.msra.mxu0 %v1202
    %1204 = vmatprep.subr.mxu0 0.0
    %v1205 = vand.u32 %v813, 4294901760
    %v1206 = vsub.f32 %v813, %v1205
    %v1207 = vand.u32 %v1206, 4294901760
    %1208 = vmatpush1.msra.mxu0 %v1207
    %1209 = vmatprep.subr.mxu0 0.0
    %v1210 = vand.u32 %v814, 4294901760
    %v1211 = vsub.f32 %v814, %v1210
    %v1212 = vand.u32 %v1211, 4294901760
    %1213 = vmatpush1.msra.mxu0 %v1212
    %1214 = vmatprep.subr.mxu0 0.0
    %v1215 = vand.u32 %v815, 4294901760
    %v1216 = vsub.f32 %v815, %v1215
    %v1217 = vand.u32 %v1216, 4294901760
    %1218 = vmatpush1.msra.mxu0 %v1217
    %1219 = vmatprep.subr.mxu0 0.0
    %v1220 = vand.u32 %v816, 4294901760
    %v1221 = vsub.f32 %v816, %v1220
    %v1222 = vand.u32 %v1221, 4294901760
    %1223 = vmatpush1.msra.mxu0 %v1222
    %1224 = vmatprep.subr.mxu0 0.0
    %1225 = vmatpush1.msra.mxu0 0.0
    %1226 = vmatprep.subr.mxu0 0.0
    %1227 = vmatpush1.msra.mxu0 0.0
    %1228 = vmatprep.subr.mxu0 0.0
    %1229 = vmatpush1.msra.mxu0 0.0
    %1230 = vmatprep.subr.mxu0 0.0
    %1231 = vmatpush1.msra.mxu0 0.0
    %1232 = vmatprep.subr.mxu0 0.0
    %1233 = vmatpush1.msra.mxu0 0.0
    %1234 = vmatprep.subr.mxu0 0.0
    %1235 = vmatpush1.msra.mxu0 0.0
    %1236 = vmatprep.subr.mxu0 0.0
    %1237 = vmatpush1.msra.mxu0 0.0
    %1238 = vmatprep.subr.mxu0 0.0
    %1239 = vmatpush1.msra.mxu0 0.0
    %1240 = vmatprep.subr.mxu0 0.0
    %1241 = vmatpush1.msra.mxu0 0.0
    %1242 = vmatprep.subr.mxu0 0.0
    %1243 = vmatpush1.msra.mxu0 0.0
    %1244 = vmatprep.subr.mxu0 0.0
    %1245 = vmatpush1.msra.mxu0 0.0
    %1246 = vmatprep.subr.mxu0 0.0
    %1247 = vmatpush1.msra.mxu0 0.0
    %1248 = vmatprep.subr.mxu0 0.0
    %1249 = vmatpush1.msra.mxu0 0.0
    %1250 = vmatprep.subr.mxu0 0.0
    %1251 = vmatpush1.msra.mxu0 0.0
    %1252 = vmatprep.subr.mxu0 0.0
    %1253 = vmatpush1.msra.mxu0 0.0
    %1254 = vmatprep.subr.mxu0 0.0
    %1255 = vmatpush1.msra.mxu0 0.0
    %1256 = vmatprep.subr.mxu0 0.0
    %1257 = vmatpush1.msra.mxu0 0.0
    %1258 = vmatprep.subr.mxu0 0.0
    %1259 = vmatpush1.msra.mxu0 0.0
    %1260 = vmatprep.subr.mxu0 0.0
    %1261 = vmatpush1.msra.mxu0 0.0
    %1262 = vmatprep.subr.mxu0 0.0
    %1263 = vmatpush1.msra.mxu0 0.0
    %1264 = vmatprep.subr.mxu0 0.0
    %1265 = vmatpush1.msra.mxu0 0.0
    %1266 = vmatprep.subr.mxu0 0.0
    %1267 = vmatpush1.msra.mxu0 0.0
    %1268 = vmatprep.subr.mxu0 0.0
    %1269 = vmatpush1.msra.mxu0 0.0
    %1270 = vmatprep.subr.mxu0 0.0
    %1271 = vmatpush1.msra.mxu0 0.0
    %1272 = vmatprep.mubr.f32.mxu0 0.0
    %v1273 = vand.u32 %v819, 4294901760
    %1274 = vmatmul.mubr.f32.gmra.mrb[0].mxu0 %v1273
    %v1275 = vpop.f32.mrb[0].mxu0
    %v1276 = vadd.f32 %v1181, %v1275
    %v1277 = vpop.f32.mrb[0].mxu0
    %1278 = vdwg.mxu0
    %1279 = vmatprep.subr.mxu0 0.0
    %v1280 = vand.u32 %v809, 4294901760
    %1281 = vmatpush1.msra.mxu0 %v1280
    %1282 = vmatprep.subr.mxu0 0.0
    %v1283 = vand.u32 %v810, 4294901760
    %1284 = vmatpush1.msra.mxu0 %v1283
    %1285 = vmatprep.subr.mxu0 0.0
    %v1286 = vand.u32 %v811, 4294901760
    %1287 = vmatpush1.msra.mxu0 %v1286
    %1288 = vmatprep.subr.mxu0 0.0
    %v1289 = vand.u32 %v812, 4294901760
    %1290 = vmatpush1.msra.mxu0 %v1289
    %1291 = vmatprep.subr.mxu0 0.0
    %v1292 = vand.u32 %v813, 4294901760
    %1293 = vmatpush1.msra.mxu0 %v1292
    %1294 = vmatprep.subr.mxu0 0.0
    %v1295 = vand.u32 %v814, 4294901760
    %1296 = vmatpush1.msra.mxu0 %v1295
    %1297 = vmatprep.subr.mxu0 0.0
    %v1298 = vand.u32 %v815, 4294901760
    %1299 = vmatpush1.msra.mxu0 %v1298
    %1300 = vmatprep.subr.mxu0 0.0
    %v1301 = vand.u32 %v816, 4294901760
    %1302 = vmatpush1.msra.mxu0 %v1301
    %1303 = vmatprep.subr.mxu0 0.0
    %1304 = vmatpush1.msra.mxu0 0.0
    %1305 = vmatprep.subr.mxu0 0.0
    %1306 = vmatpush1.msra.mxu0 0.0
    %1307 = vmatprep.subr.mxu0 0.0
    %1308 = vmatpush1.msra.mxu0 0.0
    %1309 = vmatprep.subr.mxu0 0.0
    %1310 = vmatpush1.msra.mxu0 0.0
    %1311 = vmatprep.subr.mxu0 0.0
    %1312 = vmatpush1.msra.mxu0 0.0
    %1313 = vmatprep.subr.mxu0 0.0
    %1314 = vmatpush1.msra.mxu0 0.0
    %1315 = vmatprep.subr.mxu0 0.0
    %1316 = vmatpush1.msra.mxu0 0.0
    %1317 = vmatprep.subr.mxu0 0.0
    %1318 = vmatpush1.msra.mxu0 0.0
    %1319 = vmatprep.subr.mxu0 0.0
    %1320 = vmatpush1.msra.mxu0 0.0
    %1321 = vmatprep.subr.mxu0 0.0
    %1322 = vmatpush1.msra.mxu0 0.0
    %1323 = vmatprep.subr.mxu0 0.0
    %1324 = vmatpush1.msra.mxu0 0.0
    %1325 = vmatprep.subr.mxu0 0.0
    %1326 = vmatpush1.msra.mxu0 0.0
    %1327 = vmatprep.subr.mxu0 0.0
    %1328 = vmatpush1.msra.mxu0 0.0
    %1329 = vmatprep.subr.mxu0 0.0
    %1330 = vmatpush1.msra.mxu0 0.0
    %1331 = vmatprep.subr.mxu0 0.0
    %1332 = vmatpush1.msra.mxu0 0.0
    %1333 = vmatprep.subr.mxu0 0.0
    %1334 = vmatpush1.msra.mxu0 0.0
    %1335 = vmatprep.subr.mxu0 0.0
    %1336 = vmatpush1.msra.mxu0 0.0
    %1337 = vmatprep.subr.mxu0 0.0
    %1338 = vmatpush1.msra.mxu0 0.0
    %1339 = vmatprep.subr.mxu0 0.0
    %1340 = vmatpush1.msra.mxu0 0.0
    %1341 = vmatprep.subr.mxu0 0.0
    %1342 = vmatpush1.msra.mxu0 0.0
    %1343 = vmatprep.subr.mxu0 0.0
    %1344 = vmatpush1.msra.mxu0 0.0
    %1345 = vmatprep.subr.mxu0 0.0
    %1346 = vmatpush1.msra.mxu0 0.0
    %1347 = vmatprep.subr.mxu0 0.0
    %1348 = vmatpush1.msra.mxu0 0.0
    %1349 = vmatprep.subr.mxu0 0.0
    %1350 = vmatpush1.msra.mxu0 0.0
    %1351 = vmatprep.mubr.f32.mxu0 0.0
    %v1352 = vand.u32 %v819, 4294901760
    %1353 = vmatmul.mubr.f32.gmra.mrb[0].mxu0 %v1352
    %v1354 = vpop.f32.mrb[0].mxu0
    %v1355 = vadd.f32 %v1276, %v1354
    %v1356 = vpop.f32.mrb[0].mxu0
    %1357 = vdwg.mxu0
    %v1358 = vadd.f32 %v808, %v1355
    %vm1359 = vcmask 261120
    %1360 = vst.msk [vmem:[#allocation3] sm:$0xff] %vm1359, %v1358
    // Predicated region
    $region26: #{tpu_custom_call.1} parent=1 // pred_check
      %p1361 = pneg %p21
    $region27: #{tpu_custom_call.1} parent=1 // pred_check_branch
      %1363 = sbr.rel (%p1361) target = $region29
    $region28: #{tpu_custom_call.1} parent=1 // pred_region
      %v1364 = vld [vmem:[%s1] sm:$0xff]
      %v1365 = vld [vmem:[%s0] sm:$0xff]
      %v1366 = vsub.s32 %v1364, %v1365
      %v1367 = vcvt.s32.f32 %v1366
      %v1368 = vld [vmem:[#allocation3] sm:$0xff]
      %vm1369 = vcmp.gt.f32.partialorder %v1367, 0.0
      %v1370 = vsel %vm1369, 1, 0
      %1371 = vset.pattern.permute.xlu0 0
      %1372 = vperm.xlu0 %1371, %v1370
      %v1373 = vpop.permute.xlu0 %1372
      %vm1374 = vcmp.eq.s32.totalorder %v1373, 1
      %v1375 = vsel %vm1374, %v1368, 0.0
      %1376 = vst.msk [vmem:[#allocation4] sm:$0xff] %vm1359, %v1375
    $region29: #{tpu_custom_call.1} parent=1 // pred_fallthru
      _
    // Predicated region
    $region30: #{tpu_custom_call.1} parent=1 // pred_check
      _
    $region31: #{tpu_custom_call.1} parent=1 // pred_check_branch
      %1378 = sbr.rel (0) target = $region33
    $region32: #{tpu_custom_call.1} parent=1 // pred_region
      %s1380 = ssub.s32 128, 128
      %1381 = vsyncadd [#allocation5], %s1380
      %s1383 = sshll.u32 [#allocation4], 4
      %s1384 = int_to_ptr.vmem [resolvable:$true] %s1383
      %1386 = dma.vmem_to_hbm [thread:$0]  %s1384, 128, %s5, [#allocation5]
    $region33: #{tpu_custom_call.1} parent=1 // pred_fallthru
      _
    // Predicated region
    $region34: #{tpu_custom_call.1} parent=1 // pred_check
      _
    $region35: #{tpu_custom_call.1} parent=1 // pred_check_branch
      %1388 = sbr.rel (0) target = $region37
    $region36: #{tpu_custom_call.1} parent=1 // pred_region
      %1389 = dma.done [#allocation5], 128
    $region37: #{tpu_custom_call.1} parent=1 // pred_fallthru
      _
    %1390 = vsyncpa [#allocation5], 1

</llo_original>
